<compile_context>
chip_gen: v5e
topology: v5e:2x2
jax: 0.10.0
libtpu: 0.0.40
codegen_flags: <defaults>
</compile_context>

<pallas_src>
import functools
from math import sqrt

import jax
import jax.numpy as jnp
from jax.experimental import pallas as pl
from jax.experimental.pallas import tpu as pltpu


# ----------------------------- shared math helpers -----------------------------

def _layernorm(x, gamma, beta, eps=1e-5):
    mean = jnp.mean(x, axis=-1, keepdims=True)
    var = jnp.mean(jnp.square(x - mean), axis=-1, keepdims=True)
    return (x - mean) * jax.lax.rsqrt(var + eps) * gamma + beta


def _gelu_tanh(x):
    # PyTorch nn.GELU(approximate='tanh')
    c = jnp.float32(sqrt(2.0 / jnp.pi))
    return 0.5 * x * (1.0 + jnp.tanh(c * (x + 0.044715 * x * x * x)))


# --------------------------------- kernel ---------------------------------------

def fused_decoder_kernel(
    x_ref, wqkv_ref, wo_ref, w1_ref, w2_ref, vec_ref,
    out_ref,
    act_ref,                               # VMEM scratch (Bc*S, D) f32, resident across layers
    *, num_heads, dk, batch, seq, d_model, ffn,
):
    layer = pl.program_id(1)
    f32 = jnp.float32
    bf16 = jnp.bfloat16
    D, F, S, Bc, H = d_model, ffn, seq, batch, num_heads
    N = Bc * S

    # Load this chunk's activations from HBM only on the first layer.
    @pl.when(layer == 0)
    def _():
        act_ref[...] = x_ref[...].astype(f32)

    x = act_ref[...]                       # (N, D) f32
    xb = x.astype(bf16)

    # Packed per-layer vectors: rows = [bo, ln1_g, ln1_b, b1, b2, ln2_g, ln2_b, pad].
    vecs = vec_ref[0]                      # (8, max(D,F)) f32
    bo, ln1_g, ln1_b = vecs[0:1, :D], vecs[1:2, :D], vecs[2:3, :D]
    b1 = vecs[3:4, :F]
    b2, ln2_g, ln2_b = vecs[4:5, :D], vecs[5:6, :D], vecs[6:7, :D]

    # ----- fused, lane-dense QKV projection: (N, D) @ (D, 3D) -----
    qkv = jnp.dot(xb, wqkv_ref[0], preferred_element_type=f32)          # (N, 3D) f32

    # Causal additive bias generated in-kernel (no HBM stream / VMEM buffer).
    row = jax.lax.broadcasted_iota(jnp.int32, (S, S), 0)
    col = jax.lax.broadcasted_iota(jnp.int32, (S, S), 1)
    bias = jnp.where(col > row, jnp.float32(-1e30), jnp.float32(0.0))[None]  # (1, S, S)

    scale = f32(1.0 / sqrt(dk))

    # ----- per-head attention (heads batched only where the math is per-head) -----
    head_outs = []
    for h in range(H):                     # unrolled at trace time (H is small)
        qh = qkv[:, h * dk:(h + 1) * dk].reshape(Bc, S, dk).astype(bf16)
        kh = qkv[:, D + h * dk:D + (h + 1) * dk].reshape(Bc, S, dk).astype(bf16)
        vh = qkv[:, 2 * D + h * dk:2 * D + (h + 1) * dk].reshape(Bc, S, dk).astype(bf16)

        s = jnp.einsum("bqe,bke->bqk", qh, kh, preferred_element_type=f32) * scale
        s = s + bias                                                    # (Bc, S, S)
        m = jnp.max(s, axis=-1, keepdims=True)
        p = jnp.exp(s - m)
        denom = jnp.sum(p, axis=-1, keepdims=True)
        p = p * pl.reciprocal(denom, approx=True)                       # EUP reciprocal
        pv = jnp.einsum("bqk,bke->bqe", p.astype(bf16), vh,
                        preferred_element_type=f32)                     # (Bc, S, dk)
        head_outs.append(pv.reshape(N, dk))

    msg = jnp.concatenate(head_outs, axis=-1)                           # (N, D) head-major

    # ----- fused output projection: one K=D contraction, lane-dense (N, D) -----
    attn = jnp.dot(msg.astype(bf16), wo_ref[0], preferred_element_type=f32) + bo

    # ----- residual 1 + LayerNorm (post-norm) -----
    y = _layernorm(x + attn, ln1_g, ln1_b)

    # ----- MLP: Linear -> GELU(tanh) -> Linear -----
    h1 = jnp.dot(y.astype(bf16), w1_ref[0], preferred_element_type=f32) + b1
    h1 = _gelu_tanh(h1)
    mlp = jnp.dot(h1.astype(bf16), w2_ref[0], preferred_element_type=f32) + b2

    # ----- residual 2 + LayerNorm -----
    z = _layernorm(y + mlp, ln2_g, ln2_b)
    act_ref[...] = z

    # Write the chunk's result to HBM only after the last layer.
    @pl.when(layer == pl.num_programs(1) - 1)
    def _():
        out_ref[...] = z.astype(out_ref.dtype)


# --------------------------------- wrapper ---------------------------------------

def transformer_decoder(tgt, params, num_heads, *, batch_chunks=1,
                        vmem_limit_bytes=48 * 1024 * 1024):
    """Fused L-layer causal decoder.  params: per-layer-stacked tensors (leading L axis).

    batch_chunks: number of blocks the batch is split into (first, "parallel" grid axis).
    Use 1 to stream each layer's weights exactly once; 2 on v7x to use both TensorCores.
    """
    B, S, D = tgt.shape
    L = params["wq"].shape[0]
    F = params["w1"].shape[-1]
    dk = D // num_heads
    assert dk * num_heads == D
    assert B % batch_chunks == 0
    Bc = B // batch_chunks
    N = Bc * S
    Fmax = max(D, F)

    # Host-side (one-time) weight packing.
    wqkv = jnp.concatenate([params["wq"], params["wk"], params["wv"]], axis=-1)  # (L, D, 3D)

    def pad_vec(v):
        v = v.astype(jnp.float32)
        return jnp.pad(v, ((0, 0), (0, 0), (0, Fmax - v.shape[-1])))
    vecs = jnp.concatenate([
        pad_vec(params["bo"]), pad_vec(params["ln1_g"]), pad_vec(params["ln1_b"]),
        pad_vec(params["b1"]), pad_vec(params["b2"]),
        pad_vec(params["ln2_g"]), pad_vec(params["ln2_b"]),
        jnp.zeros((L, 1, Fmax), jnp.float32),        # pad to 8 sublanes
    ], axis=1)                                       # (L, 8, Fmax)

    x2 = tgt.reshape(B * S, D)

    def wspec(shape):                                # one layer's slice per grid step
        zeros = (0,) * len(shape)
        return pl.BlockSpec((1,) + shape, lambda c, l: (l,) + zeros)

    in_specs = [
        pl.BlockSpec((N, D), lambda c, l: (c, 0)),   # activations (fetched once per chunk)
        wspec((D, 3 * D)),                           # fused Wqkv
        wspec((D, D)),                               # Wo
        wspec((D, F)),                               # W1
        wspec((F, D)),                               # W2
        wspec((8, Fmax)),                            # packed small vectors
    ]

    kernel = functools.partial(
        fused_decoder_kernel,
        num_heads=num_heads, dk=dk, batch=Bc, seq=S, d_model=D, ffn=F)

    grid_spec = pltpu.PrefetchScalarGridSpec(
        num_scalar_prefetch=0,
        grid=(batch_chunks, L),                      # L innermost => layers sequential per chunk
        in_specs=in_specs,
        out_specs=pl.BlockSpec((N, D), lambda c, l: (c, 0)),
        scratch_shapes=[pltpu.VMEM((N, D), jnp.float32)],  # resident activation
    )
    out2 = pl.pallas_call(
        kernel,
        out_shape=jax.ShapeDtypeStruct((B * S, D), tgt.dtype),
        grid_spec=grid_spec,
        compiler_params=pltpu.CompilerParams(
            dimension_semantics=("parallel", "arbitrary"),
            vmem_limit_bytes=vmem_limit_bytes),
    )(x2, wqkv, params["wo"], params["w1"], params["w2"], vecs)
    return out2.reshape(B, S, D)


# ---------------------------- parameter construction -----------------------------

def init_params(key, num_layers, d_model, num_heads, ffn_hidden):
    """Per-layer-stacked params.  Matmul weights stored bf16 as (L, in_dim, out_dim)
    (PyTorch nn.Linear weight transposed), head-major output columns for Q/K/V."""
    keys = jax.random.split(key, 6)

    def w(k, *shape):
        return (0.02 * jax.random.normal(k, (num_layers,) + shape)).astype(jnp.bfloat16)

    zeros = lambda *shape: jnp.zeros((num_layers,) + shape, jnp.float32)
    ones = lambda *shape: jnp.ones((num_layers,) + shape, jnp.float32)
    return {
        "wq": w(keys[0], d_model, d_model),
        "wk": w(keys[1], d_model, d_model),
        "wv": w(keys[2], d_model, d_model),
        "wo": w(keys[3], d_model, d_model),
        "bo": zeros(1, d_model),
        "ln1_g": ones(1, d_model), "ln1_b": zeros(1, d_model),
        "w1": w(keys[4], d_model, ffn_hidden), "b1": zeros(1, ffn_hidden),
        "w2": w(keys[5], ffn_hidden, d_model), "b2": zeros(1, d_model),
        "ln2_g": ones(1, d_model), "ln2_b": zeros(1, d_model),
    }


# ------------------------------ pure-JAX reference --------------------------------

def _reference(tgt, mask, params, num_heads):
    """f32 reference faithful to the PyTorch forward (same bf16-stored weights)."""
    x = tgt.astype(jnp.float32)
    B, S, D = x.shape
    L = params["wq"].shape[0]
    dk = D // num_heads
    for l in range(L):
        p = {name: v[l].astype(jnp.float32) for name, v in params.items()}
        q = x @ p["wq"]
        k = x @ p["wk"]
        v = x @ p["wv"]
        q = q.reshape(B, S, num_heads, dk).transpose(0, 2, 1, 3)
        k = k.reshape(B, S, num_heads, dk).transpose(0, 2, 1, 3)
        v = v.reshape(B, S, num_heads, dk).transpose(0, 2, 1, 3)
        s = jnp.einsum("bhqd,bhkd->bhqk", q, k) / sqrt(dk)
        s = jnp.where(mask[None, None] > 0, -jnp.inf, s)
        a = jax.nn.softmax(s, axis=-1)
        msg = jnp.einsum("bhqk,bhkd->bhqd", a, v).transpose(0, 2, 1, 3).reshape(B, S, D)
        attn = msg @ p["wo"] + p["bo"]
        y = _layernorm(x + attn, p["ln1_g"], p["ln1_b"])
        h1 = _gelu_tanh(y @ p["w1"] + p["b1"])
        mlp = h1 @ p["w2"] + p["b2"]
        x = _layernorm(y + mlp, p["ln2_g"], p["ln2_b"])
    return x


# ------------------------------------- main ---------------------------------------

if __name__ == "__main__":
    # Small but lane/sublane-aligned shapes: D=128 lanes, F=256, S=16 sublanes.
    B, S, D, H, F, L = 2, 16, 128, 4, 256, 2

    key = jax.random.PRNGKey(0)
    k_x, k_p = jax.random.split(key)
    tgt = jax.random.normal(k_x, (B, S, D), dtype=jnp.float32)
    # Causal mask (for the reference): 1.0 above the diagonal -> masked.
    tgt_mask = jnp.triu(jnp.ones((S, S), jnp.float32), k=1)

    params = init_params(k_p, L, D, H, F)

    out = transformer_decoder(tgt, params, H, batch_chunks=1)
    out = jax.block_until_ready(out)

    ref = _reference(tgt, tgt_mask, params, H)
    assert out.shape == (B, S, D)
    # Kernel runs matmuls with bf16 inputs (f32 accumulation); compare at bf16-level tolerance.
    assert jnp.allclose(out, ref, atol=5e-2, rtol=5e-2), \
        f"max abs err {float(jnp.max(jnp.abs(out - ref)))}"

    print("KERNEL_OK")
</pallas_src>

<mosaic_0001>
module attributes {stable_mosaic.version = 11 : i64} {
  func.func @fused_decoder_kernel(%arg0: i32, %arg1: i32, %arg2: memref<32x128xf32, #tpu.memory_space<vmem>>, %arg3: memref<1x128x384xbf16, #tpu.memory_space<vmem>>, %arg4: memref<1x128x128xbf16, #tpu.memory_space<vmem>>, %arg5: memref<1x128x256xbf16, #tpu.memory_space<vmem>>, %arg6: memref<1x256x128xbf16, #tpu.memory_space<vmem>>, %arg7: memref<1x8x256xf32, #tpu.memory_space<vmem>>, %arg8: memref<32x128xf32, #tpu.memory_space<vmem>>, %arg9: memref<32x128xf32, #tpu.memory_space<vmem>>) attributes {dimension_semantics = [#tpu.dimension_semantics<parallel>, #tpu.dimension_semantics<arbitrary>], iteration_bounds = array<i64: 1, 2>, scalar_prefetch = 0 : i64, scratch_operands = 1 : i64, tpu.core_type = #tpu.core_type<tc>, window_params = [{transform_indices = @transform_0, window_bounds = array<i64: 32, 128>}, {transform_indices = @transform_1, window_bounds = array<i64: 1, 128, 384>}, {transform_indices = @transform_2, window_bounds = array<i64: 1, 128, 128>}, {transform_indices = @transform_3, window_bounds = array<i64: 1, 128, 256>}, {transform_indices = @transform_4, window_bounds = array<i64: 1, 256, 128>}, {transform_indices = @transform_5, window_bounds = array<i64: 1, 8, 256>}, {transform_indices = @transform_6, window_bounds = array<i64: 32, 128>}]} {
    %c0_i32 = arith.constant 0 : i32
    %0 = arith.cmpi eq, %arg1, %c0_i32 : i32
    %1 = arith.extui %0 : i1 to i32
    %c0_i32_0 = arith.constant 0 : i32
    %2 = arith.cmpi ne, %1, %c0_i32_0 : i32
    scf.if %2 {
      %c0_59 = arith.constant 0 : index
      %c0_60 = arith.constant 0 : index
      %214 = vector.load %arg2[%c0_59, %c0_60] : memref<32x128xf32, #tpu.memory_space<vmem>>, vector<32x128xf32>
      %c0_61 = arith.constant 0 : index
      %c0_62 = arith.constant 0 : index
      %215 = vector.load %arg9[%c0_61, %c0_62] : memref<32x128xf32, #tpu.memory_space<vmem>>, vector<32x128xf32>
      tpu.vector_store %arg9[%c0_61, %c0_62], %214 {strides = array<i32>} : memref<32x128xf32, #tpu.memory_space<vmem>>, vector<32x128xf32>,
    } else {
    }
    %c0 = arith.constant 0 : index
    %c0_1 = arith.constant 0 : index
    %3 = vector.load %arg9[%c0, %c0_1] : memref<32x128xf32, #tpu.memory_space<vmem>>, vector<32x128xf32>
    %4 = arith.truncf %3 : vector<32x128xf32> to vector<32x128xbf16>
    %c0_2 = arith.constant 0 : index
    %c0_3 = arith.constant 0 : index
    %c0_4 = arith.constant 0 : index
    %5 = vector.load %arg7[%c0_2, %c0_3, %c0_4] : memref<1x8x256xf32, #tpu.memory_space<vmem>>, vector<1x8x256xf32>
    %6 = vector.shape_cast %5 : vector<1x8x256xf32> to vector<8x256xf32>
    %7 = vector.extract_strided_slice %6 {offsets = [0, 0], sizes = [1, 128], strides = [1, 1]} : vector<8x256xf32> to vector<1x128xf32>
    %8 = vector.extract_strided_slice %6 {offsets = [1, 0], sizes = [1, 128], strides = [1, 1]} : vector<8x256xf32> to vector<1x128xf32>
    %9 = vector.extract_strided_slice %6 {offsets = [2, 0], sizes = [1, 128], strides = [1, 1]} : vector<8x256xf32> to vector<1x128xf32>
    %10 = vector.extract_strided_slice %6 {offsets = [3, 0], sizes = [1, 256], strides = [1, 1]} : vector<8x256xf32> to vector<1x256xf32>
    %11 = vector.extract_strided_slice %6 {offsets = [4, 0], sizes = [1, 128], strides = [1, 1]} : vector<8x256xf32> to vector<1x128xf32>
    %12 = vector.extract_strided_slice %6 {offsets = [5, 0], sizes = [1, 128], strides = [1, 1]} : vector<8x256xf32> to vector<1x128xf32>
    %13 = vector.extract_strided_slice %6 {offsets = [6, 0], sizes = [1, 128], strides = [1, 1]} : vector<8x256xf32> to vector<1x128xf32>
    %c0_5 = arith.constant 0 : index
    %c0_6 = arith.constant 0 : index
    %c0_7 = arith.constant 0 : index
    %14 = vector.load %arg3[%c0_5, %c0_6, %c0_7] : memref<1x128x384xbf16, #tpu.memory_space<vmem>>, vector<1x128x384xbf16>
    %15 = vector.shape_cast %14 : vector<1x128x384xbf16> to vector<128x384xbf16>
    %cst = arith.constant dense<0.000000e+00> : vector<32x384xf32>
    %16 = tpu.matmul %4, %15, %cst {dimension_numbers = #tpu.dot_dimension_numbers<[1], [0], [0], [1], [0, 0, 1, 1], [], []>} : vector<32x128xbf16>, vector<128x384xbf16>, vector<32x384xf32> -> vector<32x384xf32>
    %17 = tpu.iota {dimensions = array<i32: 0>} : vector<16x16xi32>
    %18 = tpu.iota {dimensions = array<i32: 1>} : vector<16x16xi32>
    %19 = arith.cmpi sgt, %18, %17 : vector<16x16xi32>
    %cst_8 = arith.constant -1.000000e+30 : f32
    %cst_9 = arith.constant 0.000000e+00 : f32
    %20 = vector.broadcast %cst_8 : f32 to vector<16x16xf32>
    %21 = vector.broadcast %cst_9 : f32 to vector<16x16xf32>
    %22 = arith.select %19, %20, %21 : vector<16x16xi1>, vector<16x16xf32>
    %23 = vector.shape_cast %22 : vector<16x16xf32> to vector<1x16x16xf32>
    %24 = vector.extract_strided_slice %16 {offsets = [0, 0], sizes = [32, 32], strides = [1, 1]} : vector<32x384xf32> to vector<32x32xf32>
    %25 = vector.shape_cast %24 : vector<32x32xf32> to vector<2x16x32xf32>
    %26 = arith.truncf %25 : vector<2x16x32xf32> to vector<2x16x32xbf16>
    %27 = vector.extract_strided_slice %16 {offsets = [0, 128], sizes = [32, 32], strides = [1, 1]} : vector<32x384xf32> to vector<32x32xf32>
    %28 = vector.shape_cast %27 : vector<32x32xf32> to vector<2x16x32xf32>
    %29 = arith.truncf %28 : vector<2x16x32xf32> to vector<2x16x32xbf16>
    %30 = vector.extract_strided_slice %16 {offsets = [0, 256], sizes = [32, 32], strides = [1, 1]} : vector<32x384xf32> to vector<32x32xf32>
    %31 = vector.shape_cast %30 : vector<32x32xf32> to vector<2x16x32xf32>
    %32 = arith.truncf %31 : vector<2x16x32xf32> to vector<2x16x32xbf16>
    "tpu.trace_start"() <{level = 10 : i32, message = "bqe,bke->bqk"}> : () -> ()
    %cst_10 = arith.constant dense<0.000000e+00> : vector<2x16x16xf32>
    %33 = tpu.matmul %26, %29, %cst_10 {dimension_numbers = #tpu.dot_dimension_numbers<[2], [2], [1], [1], [0, 0, 0, 1, 1, 1], [0], [0]>} : vector<2x16x32xbf16>, vector<2x16x32xbf16>, vector<2x16x16xf32> -> vector<2x16x16xf32>
    "tpu.trace_stop"() : () -> ()
    %cst_11 = arith.constant 0.176776692 : f32
    %34 = vector.broadcast %cst_11 : f32 to vector<2x16x16xf32>
    %35 = arith.mulf %33, %34 : vector<2x16x16xf32>
    %36 = vector.broadcast %23 : vector<1x16x16xf32> to vector<2x16x16xf32>
    %37 = arith.addf %35, %36 : vector<2x16x16xf32>
    %cst_12 = arith.constant dense<0xFF800000> : vector<2x16xf32>
    %38 = vector.multi_reduction <maximumf>, %37, %cst_12 [2] : vector<2x16x16xf32> to vector<2x16xf32>
    %39 = vector.shape_cast %38 : vector<2x16xf32> to vector<2x16x1xf32>
    %40 = vector.broadcast %39 : vector<2x16x1xf32> to vector<2x16x16xf32>
    %41 = arith.subf %37, %40 : vector<2x16x16xf32>
    %42 = math.exp %41 : vector<2x16x16xf32>
    %cst_13 = arith.constant dense<0.000000e+00> : vector<2x16xf32>
    %43 = vector.multi_reduction <add>, %42, %cst_13 [2] : vector<2x16x16xf32> to vector<2x16xf32>
    %44 = vector.shape_cast %43 : vector<2x16xf32> to vector<2x16x1xf32>
    %45 = tpu.reciprocal %44 {approx = true} : vector<2x16x1xf32> -> vector<2x16x1xf32>
    %46 = vector.broadcast %45 : vector<2x16x1xf32> to vector<2x16x16xf32>
    %47 = arith.mulf %42, %46 : vector<2x16x16xf32>
    %48 = arith.truncf %47 : vector<2x16x16xf32> to vector<2x16x16xbf16>
    "tpu.trace_start"() <{level = 10 : i32, message = "bqk,bke->bqe"}> : () -> ()
    %cst_14 = arith.constant dense<0.000000e+00> : vector<2x16x32xf32>
    %49 = tpu.matmul %48, %32, %cst_14 {dimension_numbers = #tpu.dot_dimension_numbers<[2], [1], [1], [2], [0, 0, 0, 1, 1, 2], [0], [0]>} : vector<2x16x16xbf16>, vector<2x16x32xbf16>, vector<2x16x32xf32> -> vector<2x16x32xf32>
    "tpu.trace_stop"() : () -> ()
    %50 = vector.shape_cast %49 : vector<2x16x32xf32> to vector<32x32xf32>
    %51 = vector.extract_strided_slice %16 {offsets = [0, 32], sizes = [32, 32], strides = [1, 1]} : vector<32x384xf32> to vector<32x32xf32>
    %52 = vector.shape_cast %51 : vector<32x32xf32> to vector<2x16x32xf32>
    %53 = arith.truncf %52 : vector<2x16x32xf32> to vector<2x16x32xbf16>
    %54 = vector.extract_strided_slice %16 {offsets = [0, 160], sizes = [32, 32], strides = [1, 1]} : vector<32x384xf32> to vector<32x32xf32>
    %55 = vector.shape_cast %54 : vector<32x32xf32> to vector<2x16x32xf32>
    %56 = arith.truncf %55 : vector<2x16x32xf32> to vector<2x16x32xbf16>
    %57 = vector.extract_strided_slice %16 {offsets = [0, 288], sizes = [32, 32], strides = [1, 1]} : vector<32x384xf32> to vector<32x32xf32>
    %58 = vector.shape_cast %57 : vector<32x32xf32> to vector<2x16x32xf32>
    %59 = arith.truncf %58 : vector<2x16x32xf32> to vector<2x16x32xbf16>
    "tpu.trace_start"() <{level = 10 : i32, message = "bqe,bke->bqk"}> : () -> ()
    %cst_15 = arith.constant dense<0.000000e+00> : vector<2x16x16xf32>
    %60 = tpu.matmul %53, %56, %cst_15 {dimension_numbers = #tpu.dot_dimension_numbers<[2], [2], [1], [1], [0, 0, 0, 1, 1, 1], [0], [0]>} : vector<2x16x32xbf16>, vector<2x16x32xbf16>, vector<2x16x16xf32> -> vector<2x16x16xf32>
    "tpu.trace_stop"() : () -> ()
    %cst_16 = arith.constant 0.176776692 : f32
    %61 = vector.broadcast %cst_16 : f32 to vector<2x16x16xf32>
    %62 = arith.mulf %60, %61 : vector<2x16x16xf32>
    %63 = vector.broadcast %23 : vector<1x16x16xf32> to vector<2x16x16xf32>
    %64 = arith.addf %62, %63 : vector<2x16x16xf32>
    %cst_17 = arith.constant dense<0xFF800000> : vector<2x16xf32>
    %65 = vector.multi_reduction <maximumf>, %64, %cst_17 [2] : vector<2x16x16xf32> to vector<2x16xf32>
    %66 = vector.shape_cast %65 : vector<2x16xf32> to vector<2x16x1xf32>
    %67 = vector.broadcast %66 : vector<2x16x1xf32> to vector<2x16x16xf32>
    %68 = arith.subf %64, %67 : vector<2x16x16xf32>
    %69 = math.exp %68 : vector<2x16x16xf32>
    %cst_18 = arith.constant dense<0.000000e+00> : vector<2x16xf32>
    %70 = vector.multi_reduction <add>, %69, %cst_18 [2] : vector<2x16x16xf32> to vector<2x16xf32>
    %71 = vector.shape_cast %70 : vector<2x16xf32> to vector<2x16x1xf32>
    %72 = tpu.reciprocal %71 {approx = true} : vector<2x16x1xf32> -> vector<2x16x1xf32>
    %73 = vector.broadcast %72 : vector<2x16x1xf32> to vector<2x16x16xf32>
    %74 = arith.mulf %69, %73 : vector<2x16x16xf32>
    %75 = arith.truncf %74 : vector<2x16x16xf32> to vector<2x16x16xbf16>
    "tpu.trace_start"() <{level = 10 : i32, message = "bqk,bke->bqe"}> : () -> ()
    %cst_19 = arith.constant dense<0.000000e+00> : vector<2x16x32xf32>
    %76 = tpu.matmul %75, %59, %cst_19 {dimension_numbers = #tpu.dot_dimension_numbers<[2], [1], [1], [2], [0, 0, 0, 1, 1, 2], [0], [0]>} : vector<2x16x16xbf16>, vector<2x16x32xbf16>, vector<2x16x32xf32> -> vector<2x16x32xf32>
    "tpu.trace_stop"() : () -> ()
    %77 = vector.shape_cast %76 : vector<2x16x32xf32> to vector<32x32xf32>
    %78 = vector.extract_strided_slice %16 {offsets = [0, 64], sizes = [32, 32], strides = [1, 1]} : vector<32x384xf32> to vector<32x32xf32>
    %79 = vector.shape_cast %78 : vector<32x32xf32> to vector<2x16x32xf32>
    %80 = arith.truncf %79 : vector<2x16x32xf32> to vector<2x16x32xbf16>
    %81 = vector.extract_strided_slice %16 {offsets = [0, 192], sizes = [32, 32], strides = [1, 1]} : vector<32x384xf32> to vector<32x32xf32>
    %82 = vector.shape_cast %81 : vector<32x32xf32> to vector<2x16x32xf32>
    %83 = arith.truncf %82 : vector<2x16x32xf32> to vector<2x16x32xbf16>
    %84 = vector.extract_strided_slice %16 {offsets = [0, 320], sizes = [32, 32], strides = [1, 1]} : vector<32x384xf32> to vector<32x32xf32>
    %85 = vector.shape_cast %84 : vector<32x32xf32> to vector<2x16x32xf32>
    %86 = arith.truncf %85 : vector<2x16x32xf32> to vector<2x16x32xbf16>
    "tpu.trace_start"() <{level = 10 : i32, message = "bqe,bke->bqk"}> : () -> ()
    %cst_20 = arith.constant dense<0.000000e+00> : vector<2x16x16xf32>
    %87 = tpu.matmul %80, %83, %cst_20 {dimension_numbers = #tpu.dot_dimension_numbers<[2], [2], [1], [1], [0, 0, 0, 1, 1, 1], [0], [0]>} : vector<2x16x32xbf16>, vector<2x16x32xbf16>, vector<2x16x16xf32> -> vector<2x16x16xf32>
    "tpu.trace_stop"() : () -> ()
    %cst_21 = arith.constant 0.176776692 : f32
    %88 = vector.broadcast %cst_21 : f32 to vector<2x16x16xf32>
    %89 = arith.mulf %87, %88 : vector<2x16x16xf32>
    %90 = vector.broadcast %23 : vector<1x16x16xf32> to vector<2x16x16xf32>
    %91 = arith.addf %89, %90 : vector<2x16x16xf32>
    %cst_22 = arith.constant dense<0xFF800000> : vector<2x16xf32>
    %92 = vector.multi_reduction <maximumf>, %91, %cst_22 [2] : vector<2x16x16xf32> to vector<2x16xf32>
    %93 = vector.shape_cast %92 : vector<2x16xf32> to vector<2x16x1xf32>
    %94 = vector.broadcast %93 : vector<2x16x1xf32> to vector<2x16x16xf32>
    %95 = arith.subf %91, %94 : vector<2x16x16xf32>
    %96 = math.exp %95 : vector<2x16x16xf32>
    %cst_23 = arith.constant dense<0.000000e+00> : vector<2x16xf32>
    %97 = vector.multi_reduction <add>, %96, %cst_23 [2] : vector<2x16x16xf32> to vector<2x16xf32>
    %98 = vector.shape_cast %97 : vector<2x16xf32> to vector<2x16x1xf32>
    %99 = tpu.reciprocal %98 {approx = true} : vector<2x16x1xf32> -> vector<2x16x1xf32>
    %100 = vector.broadcast %99 : vector<2x16x1xf32> to vector<2x16x16xf32>
    %101 = arith.mulf %96, %100 : vector<2x16x16xf32>
    %102 = arith.truncf %101 : vector<2x16x16xf32> to vector<2x16x16xbf16>
    "tpu.trace_start"() <{level = 10 : i32, message = "bqk,bke->bqe"}> : () -> ()
    %cst_24 = arith.constant dense<0.000000e+00> : vector<2x16x32xf32>
    %103 = tpu.matmul %102, %86, %cst_24 {dimension_numbers = #tpu.dot_dimension_numbers<[2], [1], [1], [2], [0, 0, 0, 1, 1, 2], [0], [0]>} : vector<2x16x16xbf16>, vector<2x16x32xbf16>, vector<2x16x32xf32> -> vector<2x16x32xf32>
    "tpu.trace_stop"() : () -> ()
    %104 = vector.shape_cast %103 : vector<2x16x32xf32> to vector<32x32xf32>
    %105 = vector.extract_strided_slice %16 {offsets = [0, 96], sizes = [32, 32], strides = [1, 1]} : vector<32x384xf32> to vector<32x32xf32>
    %106 = vector.shape_cast %105 : vector<32x32xf32> to vector<2x16x32xf32>
    %107 = arith.truncf %106 : vector<2x16x32xf32> to vector<2x16x32xbf16>
    %108 = vector.extract_strided_slice %16 {offsets = [0, 224], sizes = [32, 32], strides = [1, 1]} : vector<32x384xf32> to vector<32x32xf32>
    %109 = vector.shape_cast %108 : vector<32x32xf32> to vector<2x16x32xf32>
    %110 = arith.truncf %109 : vector<2x16x32xf32> to vector<2x16x32xbf16>
    %111 = vector.extract_strided_slice %16 {offsets = [0, 352], sizes = [32, 32], strides = [1, 1]} : vector<32x384xf32> to vector<32x32xf32>
    %112 = vector.shape_cast %111 : vector<32x32xf32> to vector<2x16x32xf32>
    %113 = arith.truncf %112 : vector<2x16x32xf32> to vector<2x16x32xbf16>
    "tpu.trace_start"() <{level = 10 : i32, message = "bqe,bke->bqk"}> : () -> ()
    %cst_25 = arith.constant dense<0.000000e+00> : vector<2x16x16xf32>
    %114 = tpu.matmul %107, %110, %cst_25 {dimension_numbers = #tpu.dot_dimension_numbers<[2], [2], [1], [1], [0, 0, 0, 1, 1, 1], [0], [0]>} : vector<2x16x32xbf16>, vector<2x16x32xbf16>, vector<2x16x16xf32> -> vector<2x16x16xf32>
    "tpu.trace_stop"() : () -> ()
    %cst_26 = arith.constant 0.176776692 : f32
    %115 = vector.broadcast %cst_26 : f32 to vector<2x16x16xf32>
    %116 = arith.mulf %114, %115 : vector<2x16x16xf32>
    %117 = vector.broadcast %23 : vector<1x16x16xf32> to vector<2x16x16xf32>
    %118 = arith.addf %116, %117 : vector<2x16x16xf32>
    %cst_27 = arith.constant dense<0xFF800000> : vector<2x16xf32>
    %119 = vector.multi_reduction <maximumf>, %118, %cst_27 [2] : vector<2x16x16xf32> to vector<2x16xf32>
    %120 = vector.shape_cast %119 : vector<2x16xf32> to vector<2x16x1xf32>
    %121 = vector.broadcast %120 : vector<2x16x1xf32> to vector<2x16x16xf32>
    %122 = arith.subf %118, %121 : vector<2x16x16xf32>
    %123 = math.exp %122 : vector<2x16x16xf32>
    %cst_28 = arith.constant dense<0.000000e+00> : vector<2x16xf32>
    %124 = vector.multi_reduction <add>, %123, %cst_28 [2] : vector<2x16x16xf32> to vector<2x16xf32>
    %125 = vector.shape_cast %124 : vector<2x16xf32> to vector<2x16x1xf32>
    %126 = tpu.reciprocal %125 {approx = true} : vector<2x16x1xf32> -> vector<2x16x1xf32>
    %127 = vector.broadcast %126 : vector<2x16x1xf32> to vector<2x16x16xf32>
    %128 = arith.mulf %123, %127 : vector<2x16x16xf32>
    %129 = arith.truncf %128 : vector<2x16x16xf32> to vector<2x16x16xbf16>
    "tpu.trace_start"() <{level = 10 : i32, message = "bqk,bke->bqe"}> : () -> ()
    %cst_29 = arith.constant dense<0.000000e+00> : vector<2x16x32xf32>
    %130 = tpu.matmul %129, %113, %cst_29 {dimension_numbers = #tpu.dot_dimension_numbers<[2], [1], [1], [2], [0, 0, 0, 1, 1, 2], [0], [0]>} : vector<2x16x16xbf16>, vector<2x16x32xbf16>, vector<2x16x32xf32> -> vector<2x16x32xf32>
    "tpu.trace_stop"() : () -> ()
    %131 = vector.shape_cast %130 : vector<2x16x32xf32> to vector<32x32xf32>
    %132 = tpu.concatenate %50, %77, %104, %131 in 1 : vector<32x32xf32>, vector<32x32xf32>, vector<32x32xf32>, vector<32x32xf32> -> vector<32x128xf32>
    %133 = arith.truncf %132 : vector<32x128xf32> to vector<32x128xbf16>
    %c0_30 = arith.constant 0 : index
    %c0_31 = arith.constant 0 : index
    %c0_32 = arith.constant 0 : index
    %134 = vector.load %arg4[%c0_30, %c0_31, %c0_32] : memref<1x128x128xbf16, #tpu.memory_space<vmem>>, vector<1x128x128xbf16>
    %135 = vector.shape_cast %134 : vector<1x128x128xbf16> to vector<128x128xbf16>
    %cst_33 = arith.constant dense<0.000000e+00> : vector<32x128xf32>
    %136 = tpu.matmul %133, %135, %cst_33 {dimension_numbers = #tpu.dot_dimension_numbers<[1], [0], [0], [1], [0, 0, 1, 1], [], []>} : vector<32x128xbf16>, vector<128x128xbf16>, vector<32x128xf32> -> vector<32x128xf32>
    %137 = vector.broadcast %7 : vector<1x128xf32> to vector<32x128xf32>
    %138 = arith.addf %136, %137 : vector<32x128xf32>
    %139 = arith.addf %3, %138 : vector<32x128xf32>
    %cst_34 = arith.constant dense<0.000000e+00> : vector<32xf32>
    %140 = vector.multi_reduction <add>, %139, %cst_34 [1] : vector<32x128xf32> to vector<32xf32>
    %141 = vector.shape_cast %140 : vector<32xf32> to vector<32x1xf32>
    %cst_35 = arith.constant 1.280000e+02 : f32
    %142 = vector.broadcast %cst_35 : f32 to vector<32x1xf32>
    %143 = arith.divf %141, %142 : vector<32x1xf32>
    %144 = vector.broadcast %143 : vector<32x1xf32> to vector<32x128xf32>
    %145 = arith.subf %139, %144 : vector<32x128xf32>
    %146 = arith.mulf %145, %145 : vector<32x128xf32>
    %cst_36 = arith.constant dense<0.000000e+00> : vector<32xf32>
    %147 = vector.multi_reduction <add>, %146, %cst_36 [1] : vector<32x128xf32> to vector<32xf32>
    %148 = vector.shape_cast %147 : vector<32xf32> to vector<32x1xf32>
    %cst_37 = arith.constant 1.280000e+02 : f32
    %149 = vector.broadcast %cst_37 : f32 to vector<32x1xf32>
    %150 = arith.divf %148, %149 : vector<32x1xf32>
    %151 = vector.broadcast %143 : vector<32x1xf32> to vector<32x128xf32>
    %152 = arith.subf %139, %151 : vector<32x128xf32>
    %cst_38 = arith.constant 9.99999974E-6 : f32
    %153 = vector.broadcast %cst_38 : f32 to vector<32x1xf32>
    %154 = arith.addf %150, %153 : vector<32x1xf32>
    %155 = math.rsqrt %154 : vector<32x1xf32>
    %156 = vector.broadcast %155 : vector<32x1xf32> to vector<32x128xf32>
    %157 = arith.mulf %152, %156 : vector<32x128xf32>
    %158 = vector.broadcast %8 : vector<1x128xf32> to vector<32x128xf32>
    %159 = arith.mulf %157, %158 : vector<32x128xf32>
    %160 = vector.broadcast %9 : vector<1x128xf32> to vector<32x128xf32>
    %161 = arith.addf %159, %160 : vector<32x128xf32>
    %162 = arith.truncf %161 : vector<32x128xf32> to vector<32x128xbf16>
    %c0_39 = arith.constant 0 : index
    %c0_40 = arith.constant 0 : index
    %c0_41 = arith.constant 0 : index
    %163 = vector.load %arg5[%c0_39, %c0_40, %c0_41] : memref<1x128x256xbf16, #tpu.memory_space<vmem>>, vector<1x128x256xbf16>
    %164 = vector.shape_cast %163 : vector<1x128x256xbf16> to vector<128x256xbf16>
    %cst_42 = arith.constant dense<0.000000e+00> : vector<32x256xf32>
    %165 = tpu.matmul %162, %164, %cst_42 {dimension_numbers = #tpu.dot_dimension_numbers<[1], [0], [0], [1], [0, 0, 1, 1], [], []>} : vector<32x128xbf16>, vector<128x256xbf16>, vector<32x256xf32> -> vector<32x256xf32>
    %166 = vector.broadcast %10 : vector<1x256xf32> to vector<32x256xf32>
    %167 = arith.addf %165, %166 : vector<32x256xf32>
    %cst_43 = arith.constant 5.000000e-01 : f32
    %168 = vector.broadcast %cst_43 : f32 to vector<32x256xf32>
    %169 = arith.mulf %168, %167 : vector<32x256xf32>
    %cst_44 = arith.constant 4.471500e-02 : f32
    %170 = vector.broadcast %cst_44 : f32 to vector<32x256xf32>
    %171 = arith.mulf %170, %167 : vector<32x256xf32>
    %172 = arith.mulf %171, %167 : vector<32x256xf32>
    %173 = arith.mulf %172, %167 : vector<32x256xf32>
    %174 = arith.addf %167, %173 : vector<32x256xf32>
    %cst_45 = arith.constant 0.797884583 : f32
    %175 = vector.broadcast %cst_45 : f32 to vector<32x256xf32>
    %176 = arith.mulf %175, %174 : vector<32x256xf32>
    %177 = math.tanh %176 : vector<32x256xf32>
    %cst_46 = arith.constant 1.000000e+00 : f32
    %178 = vector.broadcast %cst_46 : f32 to vector<32x256xf32>
    %179 = arith.addf %178, %177 : vector<32x256xf32>
    %180 = arith.mulf %169, %179 : vector<32x256xf32>
    %181 = arith.truncf %180 : vector<32x256xf32> to vector<32x256xbf16>
    %c0_47 = arith.constant 0 : index
    %c0_48 = arith.constant 0 : index
    %c0_49 = arith.constant 0 : index
    %182 = vector.load %arg6[%c0_47, %c0_48, %c0_49] : memref<1x256x128xbf16, #tpu.memory_space<vmem>>, vector<1x256x128xbf16>
    %183 = vector.shape_cast %182 : vector<1x256x128xbf16> to vector<256x128xbf16>
    %cst_50 = arith.constant dense<0.000000e+00> : vector<32x128xf32>
    %184 = tpu.matmul %181, %183, %cst_50 {dimension_numbers = #tpu.dot_dimension_numbers<[1], [0], [0], [1], [0, 0, 1, 1], [], []>} : vector<32x256xbf16>, vector<256x128xbf16>, vector<32x128xf32> -> vector<32x128xf32>
    %185 = vector.broadcast %11 : vector<1x128xf32> to vector<32x128xf32>
    %186 = arith.addf %184, %185 : vector<32x128xf32>
    %187 = arith.addf %161, %186 : vector<32x128xf32>
    %cst_51 = arith.constant dense<0.000000e+00> : vector<32xf32>
    %188 = vector.multi_reduction <add>, %187, %cst_51 [1] : vector<32x128xf32> to vector<32xf32>
    %189 = vector.shape_cast %188 : vector<32xf32> to vector<32x1xf32>
    %cst_52 = arith.constant 1.280000e+02 : f32
    %190 = vector.broadcast %cst_52 : f32 to vector<32x1xf32>
    %191 = arith.divf %189, %190 : vector<32x1xf32>
    %192 = vector.broadcast %191 : vector<32x1xf32> to vector<32x128xf32>
    %193 = arith.subf %187, %192 : vector<32x128xf32>
    %194 = arith.mulf %193, %193 : vector<32x128xf32>
    %cst_53 = arith.constant dense<0.000000e+00> : vector<32xf32>
    %195 = vector.multi_reduction <add>, %194, %cst_53 [1] : vector<32x128xf32> to vector<32xf32>
    %196 = vector.shape_cast %195 : vector<32xf32> to vector<32x1xf32>
    %cst_54 = arith.constant 1.280000e+02 : f32
    %197 = vector.broadcast %cst_54 : f32 to vector<32x1xf32>
    %198 = arith.divf %196, %197 : vector<32x1xf32>
    %199 = vector.broadcast %191 : vector<32x1xf32> to vector<32x128xf32>
    %200 = arith.subf %187, %199 : vector<32x128xf32>
    %cst_55 = arith.constant 9.99999974E-6 : f32
    %201 = vector.broadcast %cst_55 : f32 to vector<32x1xf32>
    %202 = arith.addf %198, %201 : vector<32x1xf32>
    %203 = math.rsqrt %202 : vector<32x1xf32>
    %204 = vector.broadcast %203 : vector<32x1xf32> to vector<32x128xf32>
    %205 = arith.mulf %200, %204 : vector<32x128xf32>
    %206 = vector.broadcast %12 : vector<1x128xf32> to vector<32x128xf32>
    %207 = arith.mulf %205, %206 : vector<32x128xf32>
    %208 = vector.broadcast %13 : vector<1x128xf32> to vector<32x128xf32>
    %209 = arith.addf %207, %208 : vector<32x128xf32>
    %c0_56 = arith.constant 0 : index
    %c0_57 = arith.constant 0 : index
    %210 = vector.load %arg9[%c0_56, %c0_57] : memref<32x128xf32, #tpu.memory_space<vmem>>, vector<32x128xf32>
    tpu.vector_store %arg9[%c0_56, %c0_57], %209 {strides = array<i32>} : memref<32x128xf32, #tpu.memory_space<vmem>>, vector<32x128xf32>,
    %c1_i32 = arith.constant 1 : i32
    %211 = arith.cmpi eq, %arg1, %c1_i32 : i32
    %212 = arith.extui %211 : i1 to i32
    %c0_i32_58 = arith.constant 0 : i32
    %213 = arith.cmpi ne, %212, %c0_i32_58 : i32
    scf.if %213 {
      %c0_59 = arith.constant 0 : index
      %c0_60 = arith.constant 0 : index
      %214 = vector.load %arg8[%c0_59, %c0_60] : memref<32x128xf32, #tpu.memory_space<vmem>>, vector<32x128xf32>
      tpu.vector_store %arg8[%c0_59, %c0_60], %209 {strides = array<i32>} : memref<32x128xf32, #tpu.memory_space<vmem>>, vector<32x128xf32>,
    } else {
    }
    return
  }
  func.func @transform_0(%arg0: i32, %arg1: i32) -> (i32, i32) {
    %c0_i32 = arith.constant 0 : i32
    %c0_i32_0 = arith.constant 0 : i32
    return %arg0, %c0_i32 : i32, i32
  }
  func.func @transform_1(%arg0: i32, %arg1: i32) -> (i32, i32, i32) {
    %c0_i32 = arith.constant 0 : i32
    %c0_i32_0 = arith.constant 0 : i32
    %c0_i32_1 = arith.constant 0 : i32
    return %arg1, %c0_i32, %c0_i32_0 : i32, i32, i32
  }
  func.func @transform_2(%arg0: i32, %arg1: i32) -> (i32, i32, i32) {
    %c0_i32 = arith.constant 0 : i32
    %c0_i32_0 = arith.constant 0 : i32
    %c0_i32_1 = arith.constant 0 : i32
    return %arg1, %c0_i32, %c0_i32_0 : i32, i32, i32
  }
  func.func @transform_3(%arg0: i32, %arg1: i32) -> (i32, i32, i32) {
    %c0_i32 = arith.constant 0 : i32
    %c0_i32_0 = arith.constant 0 : i32
    %c0_i32_1 = arith.constant 0 : i32
    return %arg1, %c0_i32, %c0_i32_0 : i32, i32, i32
  }
  func.func @transform_4(%arg0: i32, %arg1: i32) -> (i32, i32, i32) {
    %c0_i32 = arith.constant 0 : i32
    %c0_i32_0 = arith.constant 0 : i32
    %c0_i32_1 = arith.constant 0 : i32
    return %arg1, %c0_i32, %c0_i32_0 : i32, i32, i32
  }
  func.func @transform_5(%arg0: i32, %arg1: i32) -> (i32, i32, i32) {
    %c0_i32 = arith.constant 0 : i32
    %c0_i32_0 = arith.constant 0 : i32
    %c0_i32_1 = arith.constant 0 : i32
    return %arg1, %c0_i32, %c0_i32_0 : i32, i32, i32
  }
  func.func @transform_6(%arg0: i32, %arg1: i32) -> (i32, i32) {
    %c0_i32 = arith.constant 0 : i32
    %c0_i32_0 = arith.constant 0 : i32
    return %arg0, %c0_i32 : i32, i32
  }
}

</mosaic_0001>

<llo_original>
// kernel: tpu_custom_call.1
$region0: #{tpu_custom_call.1}
  #allocation0 [shape = 'u32[]', space=smem, size = 0x4, offset = 0x4, fixed_abs, tag = 'smem constant byte address 0x4 - core index']
  #allocation1 [shape = 'u32[72,128]{1,0:T(1,128)}', space=vmem, size = 0x9000, scoped, tag = 'internal scratch']
  #allocation2 [shape = 'f32[32,128]{1,0:T(8,128)}', space=vmem, size = 0x4000, scoped, tag = 'scratch operand']
  %s0 = inlined_call_operand.hbm [shape: f32[32,128], index: 0, kind: input, shape index: {}]
  %s1 = inlined_call_operand.hbm [shape: bf16[2,128,384], index: 1, kind: input, shape index: {}]
  %s2 = inlined_call_operand.hbm [shape: bf16[2,128,128], index: 2, kind: input, shape index: {}]
  %s3 = inlined_call_operand.hbm [shape: bf16[2,128,256], index: 3, kind: input, shape index: {}]
  %s4 = inlined_call_operand.hbm [shape: bf16[2,256,128], index: 4, kind: input, shape index: {}]
  %s5 = inlined_call_operand.hbm [shape: f32[2,8,256], index: 5, kind: input, shape index: {}]
  %s6 = inlined_call_operand.hbm [shape: f32[32,128], index: 6, kind: output, shape index: {}]
  %s7 = sld [smem:[#allocation0]]
  $region89: #{tpu_custom_call.1} parent=0
    _
  %s9 = ssub.s32 1, %s7
  %s10 = scalar_select 0, %s9, %s7
  $region1: #{tpu_custom_call.1} parent=0
    #allocation3 [shape = 'u8[16384]{0}', space=vmem, size = 0x4000, scoped, tag = 'input window, operand 0, single buffered']
    #allocation4 [shape = 's32[2]{0}', space=sflag, size = 0x8, scoped, tag = 'scoped memory for tpu_custom_call.1']
    #allocation5 [shape = 's32[2]{0}', space=sflag, size = 0x8, scoped, tag = 'scoped memory for tpu_custom_call.1']
    #allocation6 [shape = 'u8[196608]{0}', space=vmem, size = 0x30000, scoped, tag = 'input window, operand 1']
    #allocation7 [shape = 's32[2]{0}', space=sflag, size = 0x8, scoped, tag = 'scoped memory for tpu_custom_call.1']
    #allocation8 [shape = 'u8[65536]{0}', space=vmem, size = 0x10000, scoped, tag = 'input window, operand 2']
    #allocation9 [shape = 'u8[131072]{0}', space=vmem, size = 0x20000, scoped, tag = 'input window, operand 3']
    #allocation10 [shape = 's32[2]{0}', space=sflag, size = 0x8, scoped, tag = 'scoped memory for tpu_custom_call.1']
    #allocation11 [shape = 'u8[131072]{0}', space=vmem, size = 0x20000, scoped, tag = 'input window, operand 4']
    #allocation12 [shape = 'u8[16384]{0}', space=vmem, size = 0x4000, scoped, tag = 'input window, operand 5']
    #allocation13 [shape = 's32[2]{0}', space=sflag, size = 0x8, scoped, tag = 'scoped memory for tpu_custom_call.1']
    #allocation14 [shape = 'u8[16384]{0}', space=vmem, size = 0x4000, scoped, tag = 'output window, operand 0, single buffered']
    %11 = vsyncpa [#allocation4], 0
    %12 = vsyncpa [#allocation7], 0
    %s13 = scalar_lea.sflag [#allocation7], 1
    %14 = vsyncpa %s13, 0
    %15 = vsyncpa [#allocation10], 0
    %s16 = scalar_lea.sflag [#allocation10], 1
    %17 = vsyncpa %s16, 0
    %18 = vsyncpa [#allocation13], 0
    %s19 = scalar_lea.sflag [#allocation13], 1
    %20 = vsyncpa %s19, 0
    %21 = vsyncpa [#allocation5], 0
    loop: start=0, step=1, limit=4
    $region2: #{tpu_custom_call.1} parent=1 // loop_pre_header
      _
    $region3: #{tpu_custom_call.1} parent=1 // loop_header
      %s23 = sphi 0, %s27
      %p24 = scmp.ge.s32.totalorder %s23, 4
      %s30 = sphi 0, %s42
      %s31 = sphi 0, %s38
      %s32 = sphi 0, %s30
      %s33 = sphi 0, %s31
      %s34 = sphi 0, %s32
      %s35 = sphi 0, %s33
      %s45 = sphi 0, %s47
      %s48 = sphi 0, %s45
      %s49 = sphi 0, %s48
      %s65 = sphi 0, %s49
      %s71 = sphi 0, %s73
      %s74 = sphi 0, %s71
      %s75 = sphi 0, %s74
      %s91 = sphi 0, %s75
      %s97 = sphi 0, %s99
      %s100 = sphi 0, %s97
      %s101 = sphi 0, %s100
      %s117 = sphi 0, %s101
      %s123 = sphi 0, %s125
      %s126 = sphi 0, %s123
      %s127 = sphi 0, %s126
      %s143 = sphi 0, %s127
      %s149 = sphi 0, %s151
      %s152 = sphi 0, %s149
      %s153 = sphi 0, %s152
      %s169 = sphi 0, %s153
      %s175 = sphi 0, %s177
      %s178 = sphi 0, %s175
      %s179 = sphi 0, %s178
      %s195 = sphi 0, %s179
      %s201 = sphi 0, %s203
      %s204 = sphi 0, %s201
      %s205 = sphi 0, %s204
      %s221 = sphi 0, %s205
    $region4: #{tpu_custom_call.1} parent=1 // loop_header_branch
      %26 = sbr.rel (%p24) target = $region8
    $region5: #{tpu_custom_call.1} parent=1 // loop_body
      %s28 = ssub.s32 %s23, 1
      %s29 = ssub.s32 %s23, 2
      %s36 = sadd.s32 1, %s31
      %p37 = scmp.ge.s32.totalorder %s36, 2
      %s38 = scalar_select %p37, 0, %s36
      %s39 = sadd.s32 1, %s30
      %s40 = scalar_select %p37, %s39, %s30
      %p41 = scmp.ge.s32.totalorder %s40, 1
      %s42 = scalar_select %p41, 0, %s40
      %s43 = ssub.s32 %s30, %s42
      %p44 = scmp.eq.s32.totalorder %s43, 0
      %s46 = sadd.s32 %s45, 1
      %s47 = scalar_select %p44, %s45, %s46
      %p50 = pneg %p44
      %p51 = scmp.eq.s32.totalorder %s23, 1
      %p52 = por %p50, %p51
      %p53 = scmp.ne.s32.totalorder %s45, %s48
      %p54 = scmp.eq.s32.totalorder %s23, 0
      %p55 = por %p53, %p54
      %p56 = scmp.ne.s32.totalorder %s45, %s48
      %p57 = scmp.eq.s32.totalorder %s28, 1
      %p58 = por %p56, %p57
      %p59 = scmp.ne.s32.totalorder %s48, %s49
      %p60 = scmp.eq.s32.totalorder %s28, 0
      %p61 = por %p59, %p60
      %p62 = scmp.ne.s32.totalorder %s48, %s49
      %p63 = scmp.eq.s32.totalorder %s29, 1
      %p64 = por %p62, %p63
      %p66 = scmp.ne.s32.totalorder %s49, %s65
      %p67 = scmp.eq.s32.totalorder %s29, 0
      %p68 = por %p66, %p67
      %s69 = ssub.s32 %s31, %s38
      %p70 = scmp.eq.s32.totalorder %s69, 0
      %s72 = sadd.s32 %s71, 1
      %s73 = scalar_select %p70, %s71, %s72
      %p76 = pneg %p70
      %p77 = scmp.eq.s32.totalorder %s23, 1
      %p78 = por %p76, %p77
      %p79 = scmp.ne.s32.totalorder %s71, %s74
      %p80 = scmp.eq.s32.totalorder %s23, 0
      %p81 = por %p79, %p80
      %p82 = scmp.ne.s32.totalorder %s71, %s74
      %p83 = scmp.eq.s32.totalorder %s28, 1
      %p84 = por %p82, %p83
      %p85 = scmp.ne.s32.totalorder %s74, %s75
      %p86 = scmp.eq.s32.totalorder %s28, 0
      %p87 = por %p85, %p86
      %p88 = scmp.ne.s32.totalorder %s74, %s75
      %p89 = scmp.eq.s32.totalorder %s29, 1
      %p90 = por %p88, %p89
      %p92 = scmp.ne.s32.totalorder %s75, %s91
      %p93 = scmp.eq.s32.totalorder %s29, 0
      %p94 = por %p92, %p93
      %s95 = ssub.s32 %s31, %s38
      %p96 = scmp.eq.s32.totalorder %s95, 0
      %s98 = sadd.s32 %s97, 1
      %s99 = scalar_select %p96, %s97, %s98
      %p102 = pneg %p96
      %p103 = scmp.eq.s32.totalorder %s23, 1
      %p104 = por %p102, %p103
      %p105 = scmp.ne.s32.totalorder %s97, %s100
      %p106 = scmp.eq.s32.totalorder %s23, 0
      %p107 = por %p105, %p106
      %p108 = scmp.ne.s32.totalorder %s97, %s100
      %p109 = scmp.eq.s32.totalorder %s28, 1
      %p110 = por %p108, %p109
      %p111 = scmp.ne.s32.totalorder %s100, %s101
      %p112 = scmp.eq.s32.totalorder %s28, 0
      %p113 = por %p111, %p112
      %p114 = scmp.ne.s32.totalorder %s100, %s101
      %p115 = scmp.eq.s32.totalorder %s29, 1
      %p116 = por %p114, %p115
      %p118 = scmp.ne.s32.totalorder %s101, %s117
      %p119 = scmp.eq.s32.totalorder %s29, 0
      %p120 = por %p118, %p119
      %s121 = ssub.s32 %s31, %s38
      %p122 = scmp.eq.s32.totalorder %s121, 0
      %s124 = sadd.s32 %s123, 1
      %s125 = scalar_select %p122, %s123, %s124
      %p128 = pneg %p122
      %p129 = scmp.eq.s32.totalorder %s23, 1
      %p130 = por %p128, %p129
      %p131 = scmp.ne.s32.totalorder %s123, %s126
      %p132 = scmp.eq.s32.totalorder %s23, 0
      %p133 = por %p131, %p132
      %p134 = scmp.ne.s32.totalorder %s123, %s126
      %p135 = scmp.eq.s32.totalorder %s28, 1
      %p136 = por %p134, %p135
      %p137 = scmp.ne.s32.totalorder %s126, %s127
      %p138 = scmp.eq.s32.totalorder %s28, 0
      %p139 = por %p137, %p138
      %p140 = scmp.ne.s32.totalorder %s126, %s127
      %p141 = scmp.eq.s32.totalorder %s29, 1
      %p142 = por %p140, %p141
      %p144 = scmp.ne.s32.totalorder %s127, %s143
      %p145 = scmp.eq.s32.totalorder %s29, 0
      %p146 = por %p144, %p145
      %s147 = ssub.s32 %s31, %s38
      %p148 = scmp.eq.s32.totalorder %s147, 0
      %s150 = sadd.s32 %s149, 1
      %s151 = scalar_select %p148, %s149, %s150
      %p154 = pneg %p148
      %p155 = scmp.eq.s32.totalorder %s23, 1
      %p156 = por %p154, %p155
      %p157 = scmp.ne.s32.totalorder %s149, %s152
      %p158 = scmp.eq.s32.totalorder %s23, 0
      %p159 = por %p157, %p158
      %p160 = scmp.ne.s32.totalorder %s149, %s152
      %p161 = scmp.eq.s32.totalorder %s28, 1
      %p162 = por %p160, %p161
      %p163 = scmp.ne.s32.totalorder %s152, %s153
      %p164 = scmp.eq.s32.totalorder %s28, 0
      %p165 = por %p163, %p164
      %p166 = scmp.ne.s32.totalorder %s152, %s153
      %p167 = scmp.eq.s32.totalorder %s29, 1
      %p168 = por %p166, %p167
      %p170 = scmp.ne.s32.totalorder %s153, %s169
      %p171 = scmp.eq.s32.totalorder %s29, 0
      %p172 = por %p170, %p171
      %s173 = ssub.s32 %s31, %s38
      %p174 = scmp.eq.s32.totalorder %s173, 0
      %s176 = sadd.s32 %s175, 1
      %s177 = scalar_select %p174, %s175, %s176
      %p180 = pneg %p174
      %p181 = scmp.eq.s32.totalorder %s23, 1
      %p182 = por %p180, %p181
      %p183 = scmp.ne.s32.totalorder %s175, %s178
      %p184 = scmp.eq.s32.totalorder %s23, 0
      %p185 = por %p183, %p184
      %p186 = scmp.ne.s32.totalorder %s175, %s178
      %p187 = scmp.eq.s32.totalorder %s28, 1
      %p188 = por %p186, %p187
      %p189 = scmp.ne.s32.totalorder %s178, %s179
      %p190 = scmp.eq.s32.totalorder %s28, 0
      %p191 = por %p189, %p190
      %p192 = scmp.ne.s32.totalorder %s178, %s179
      %p193 = scmp.eq.s32.totalorder %s29, 1
      %p194 = por %p192, %p193
      %p196 = scmp.ne.s32.totalorder %s179, %s195
      %p197 = scmp.eq.s32.totalorder %s29, 0
      %p198 = por %p196, %p197
      %s199 = ssub.s32 %s30, %s42
      %p200 = scmp.eq.s32.totalorder %s199, 0
      %s202 = sadd.s32 %s201, 1
      %s203 = scalar_select %p200, %s201, %s202
      %p206 = pneg %p200
      %p207 = scmp.eq.s32.totalorder %s23, 1
      %p208 = por %p206, %p207
      %p209 = scmp.ne.s32.totalorder %s201, %s204
      %p210 = scmp.eq.s32.totalorder %s23, 0
      %p211 = por %p209, %p210
      %p212 = scmp.ne.s32.totalorder %s201, %s204
      %p213 = scmp.eq.s32.totalorder %s28, 1
      %p214 = por %p212, %p213
      %p215 = scmp.ne.s32.totalorder %s204, %s205
      %p216 = scmp.eq.s32.totalorder %s28, 0
      %p217 = por %p215, %p216
      %p218 = scmp.ne.s32.totalorder %s204, %s205
      %p219 = scmp.eq.s32.totalorder %s29, 1
      %p220 = por %p218, %p219
      %p222 = scmp.ne.s32.totalorder %s205, %s221
      %p223 = scmp.eq.s32.totalorder %s29, 0
      %p224 = por %p222, %p223
      %p225 = scmp.le.s32.totalorder 1, %s23
      %p226 = scmp.lt.s32.totalorder %s23, 3
      %p227 = pnand %p225, %p226
      %p228 = pneg %p227
      // Predicated region
      $region9: #{tpu_custom_call.1} parent=5 // pred_check
        _
      $region10: #{tpu_custom_call.1} parent=5 // pred_check_branch
        %230 = sbr.rel (%p227) target = $region12
      $region11: #{tpu_custom_call.1} parent=5 // pred_region
        %s231 = ssub.s32 %s23, 1
        // Predicated region
        $region13: #{tpu_custom_call.1} parent=11 // pred_check
          %p232 = pneg %p61
        $region14: #{tpu_custom_call.1} parent=11 // pred_check_branch
          %234 = sbr.rel (%p232) target = $region16
        $region15: #{tpu_custom_call.1} parent=11 // pred_region
          %s235 = smul.u32 4, %s32
          %237 = vsyncadd [#allocation4], 0
          %s238 = smul.addr %s235, 8
          %s239 = scalar_lea.hbm %s0, %s238
          %s240 = sshll.u32 %s239, 4
          %s241 = int_to_ptr.hbm [resolvable:$true] %s240
          %s242 = sshll.u32 [#allocation3], 4
          %s243 = int_to_ptr.vmem [resolvable:$true] %s242
          %248 = dma.hbm_to_vmem [thread:$0]  %s241, 512, %s243, [#allocation4], 128, 128, 8
        $region16: #{tpu_custom_call.1} parent=11 // pred_fallthru
          _
      $region12: #{tpu_custom_call.1} parent=5 // pred_fallthru
        _
      %p249 = scmp.lt.s32.totalorder %s23, 2
      // Predicated region
      $region17: #{tpu_custom_call.1} parent=5 // pred_check
        %p250 = pneg %p249
      $region18: #{tpu_custom_call.1} parent=5 // pred_check_branch
        %252 = sbr.rel (%p250) target = $region20
      $region19: #{tpu_custom_call.1} parent=5 // pred_region
        // Predicated region
        $region21: #{tpu_custom_call.1} parent=19 // pred_check
          %p253 = pneg %p81
        $region22: #{tpu_custom_call.1} parent=19 // pred_check_branch
          %255 = sbr.rel (%p253) target = $region24
        $region23: #{tpu_custom_call.1} parent=19 // pred_region
          %s256 = sand.u32 %s23, 1
          %s257 = scalar_lea.sflag [#allocation7], %s256
          %s258 = sand.u32 %s71, 1
          %s259 = smul.addr %s258, 192
          %s260 = scalar_lea.vmem [#allocation6], %s259
          %262 = vsyncadd %s257, 0
          %s263 = smul.addr %s31, 48
          %s264 = smul.addr %s263, 4
          %s265 = scalar_lea.hbm %s1, %s264
          %s266 = sshll.u32 %s265, 4
          %s267 = int_to_ptr.hbm [resolvable:$true] %s266
          %s268 = sshll.u32 %s260, 4
          %s269 = int_to_ptr.vmem [resolvable:$true] %s268
          %274 = dma.hbm_to_vmem [thread:$0]  %s267, 3072, %s269, %s257, 192, 192, 12
        $region24: #{tpu_custom_call.1} parent=19 // pred_fallthru
          _
        // Predicated region
        $region25: #{tpu_custom_call.1} parent=19 // pred_check
          %p275 = pneg %p107
        $region26: #{tpu_custom_call.1} parent=19 // pred_check_branch
          %277 = sbr.rel (%p275) target = $region28
        $region27: #{tpu_custom_call.1} parent=19 // pred_region
          %s278 = sand.u32 %s23, 1
          %s279 = scalar_lea.sflag [#allocation7], %s278
          %s280 = sand.u32 %s97, 1
          %s281 = smul.addr %s280, 64
          %s282 = scalar_lea.vmem [#allocation8], %s281
          %284 = vsyncadd %s279, 0
          %s285 = smul.addr %s31, 16
          %s286 = smul.addr %s285, 4
          %s287 = scalar_lea.hbm %s2, %s286
          %s288 = sshll.u32 %s287, 4
          %s289 = int_to_ptr.hbm [resolvable:$true] %s288
          %s290 = sshll.u32 %s282, 4
          %s291 = int_to_ptr.vmem [resolvable:$true] %s290
          %296 = dma.hbm_to_vmem [thread:$0]  %s289, 1024, %s291, %s279, 64, 64, 4
        $region28: #{tpu_custom_call.1} parent=19 // pred_fallthru
          _
        // Predicated region
        $region29: #{tpu_custom_call.1} parent=19 // pred_check
          %p297 = pneg %p133
        $region30: #{tpu_custom_call.1} parent=19 // pred_check_branch
          %299 = sbr.rel (%p297) target = $region32
        $region31: #{tpu_custom_call.1} parent=19 // pred_region
          %s300 = sand.u32 %s23, 1
          %s301 = scalar_lea.sflag [#allocation10], %s300
          %s302 = sand.u32 %s123, 1
          %s303 = smul.addr %s302, 128
          %s304 = scalar_lea.vmem [#allocation9], %s303
          %306 = vsyncadd %s301, 0
          %s307 = smul.addr %s31, 32
          %s308 = smul.addr %s307, 4
          %s309 = scalar_lea.hbm %s3, %s308
          %s310 = sshll.u32 %s309, 4
          %s311 = int_to_ptr.hbm [resolvable:$true] %s310
          %s312 = sshll.u32 %s304, 4
          %s313 = int_to_ptr.vmem [resolvable:$true] %s312
          %318 = dma.hbm_to_vmem [thread:$0]  %s311, 2048, %s313, %s301, 128, 128, 8
        $region32: #{tpu_custom_call.1} parent=19 // pred_fallthru
          _
        // Predicated region
        $region33: #{tpu_custom_call.1} parent=19 // pred_check
          %p319 = pneg %p159
        $region34: #{tpu_custom_call.1} parent=19 // pred_check_branch
          %321 = sbr.rel (%p319) target = $region36
        $region35: #{tpu_custom_call.1} parent=19 // pred_region
          %s322 = sand.u32 %s23, 1
          %s323 = scalar_lea.sflag [#allocation10], %s322
          %s324 = sand.u32 %s149, 1
          %s325 = smul.addr %s324, 128
          %s326 = scalar_lea.vmem [#allocation11], %s325
          %328 = vsyncadd %s323, 0
          %s329 = smul.addr %s31, 32
          %s330 = smul.addr %s329, 4
          %s331 = scalar_lea.hbm %s4, %s330
          %s332 = sshll.u32 %s331, 4
          %s333 = int_to_ptr.hbm [resolvable:$true] %s332
          %s334 = sshll.u32 %s326, 4
          %s335 = int_to_ptr.vmem [resolvable:$true] %s334
          %340 = dma.hbm_to_vmem [thread:$0]  %s333, 2048, %s335, %s323, 64, 64, 4
        $region36: #{tpu_custom_call.1} parent=19 // pred_fallthru
          _
        // Predicated region
        $region37: #{tpu_custom_call.1} parent=19 // pred_check
          %p341 = pneg %p185
        $region38: #{tpu_custom_call.1} parent=19 // pred_check_branch
          %343 = sbr.rel (%p341) target = $region40
        $region39: #{tpu_custom_call.1} parent=19 // pred_region
          %s344 = sand.u32 %s175, 1
          %s345 = scalar_lea.sflag [#allocation13], %s344
          %s346 = sand.u32 %s175, 1
          %s347 = smul.addr %s346, 16
          %s348 = scalar_lea.vmem [#allocation12], %s347
          %350 = vsyncadd %s345, 0
          %s351 = smul.addr %s31, 2
          %s352 = smul.addr %s351, 8
          %s353 = scalar_lea.hbm %s5, %s352
          %s355 = sshll.u32 %s353, 4
          %s356 = int_to_ptr.hbm [resolvable:$true] %s355
          %s357 = sshll.u32 %s348, 4
          %s358 = int_to_ptr.vmem [resolvable:$true] %s357
          %360 = dma.hbm_to_vmem [thread:$0]  %s356, 256, %s358, %s345
        $region40: #{tpu_custom_call.1} parent=19 // pred_fallthru
          _
      $region20: #{tpu_custom_call.1} parent=5 // pred_fallthru
        _
      %p361 = scmp.le.s32.totalorder 1, %s23
      %p362 = scmp.lt.s32.totalorder %s23, 3
      %p363 = pnand %p361, %p362
      %p364 = pneg %p363
      // Predicated region
      $region41: #{tpu_custom_call.1} parent=5 // pred_check
        _
      $region42: #{tpu_custom_call.1} parent=5 // pred_check_branch
        %366 = sbr.rel (%p363) target = $region44
      $region43: #{tpu_custom_call.1} parent=5 // pred_region
        %s367 = ssub.s32 %s23, 1
        // Predicated region
        $region45: #{tpu_custom_call.1} parent=43 // pred_check
          %p368 = pneg %p61
        $region46: #{tpu_custom_call.1} parent=43 // pred_check_branch
          %370 = sbr.rel (%p368) target = $region48
        $region47: #{tpu_custom_call.1} parent=43 // pred_region
          %372 = dma.done [#allocation4], 512
        $region48: #{tpu_custom_call.1} parent=43 // pred_fallthru
          _
        %s373 = sand.u32 %s28, 1
        %s374 = scalar_lea.sflag [#allocation7], %s373
        %s375 = sand.u32 %s74, 1
        %s376 = smul.addr %s375, 192
        %s377 = scalar_lea.vmem [#allocation6], %s376
        // Predicated region
        $region49: #{tpu_custom_call.1} parent=43 // pred_check
          %p378 = pneg %p87
        $region50: #{tpu_custom_call.1} parent=43 // pred_check_branch
          %380 = sbr.rel (%p378) target = $region52
        $region51: #{tpu_custom_call.1} parent=43 // pred_region
          %382 = dma.done %s374, 3072
        $region52: #{tpu_custom_call.1} parent=43 // pred_fallthru
          _
        %s383 = sand.u32 %s28, 1
        %s384 = scalar_lea.sflag [#allocation7], %s383
        %s385 = sand.u32 %s100, 1
        %s386 = smul.addr %s385, 64
        %s387 = scalar_lea.vmem [#allocation8], %s386
        // Predicated region
        $region53: #{tpu_custom_call.1} parent=43 // pred_check
          %p388 = pneg %p113
        $region54: #{tpu_custom_call.1} parent=43 // pred_check_branch
          %390 = sbr.rel (%p388) target = $region56
        $region55: #{tpu_custom_call.1} parent=43 // pred_region
          %392 = dma.done %s384, 1024
        $region56: #{tpu_custom_call.1} parent=43 // pred_fallthru
          _
        %s393 = sand.u32 %s28, 1
        %s394 = scalar_lea.sflag [#allocation10], %s393
        %s395 = sand.u32 %s126, 1
        %s396 = smul.addr %s395, 128
        %s397 = scalar_lea.vmem [#allocation9], %s396
        // Predicated region
        $region57: #{tpu_custom_call.1} parent=43 // pred_check
          %p398 = pneg %p139
        $region58: #{tpu_custom_call.1} parent=43 // pred_check_branch
          %400 = sbr.rel (%p398) target = $region60
        $region59: #{tpu_custom_call.1} parent=43 // pred_region
          %402 = dma.done %s394, 2048
        $region60: #{tpu_custom_call.1} parent=43 // pred_fallthru
          _
        %s403 = sand.u32 %s28, 1
        %s404 = scalar_lea.sflag [#allocation10], %s403
        %s405 = sand.u32 %s152, 1
        %s406 = smul.addr %s405, 128
        %s407 = scalar_lea.vmem [#allocation11], %s406
        // Predicated region
        $region61: #{tpu_custom_call.1} parent=43 // pred_check
          %p408 = pneg %p165
        $region62: #{tpu_custom_call.1} parent=43 // pred_check_branch
          %410 = sbr.rel (%p408) target = $region64
        $region63: #{tpu_custom_call.1} parent=43 // pred_region
          %412 = dma.done %s404, 2048
        $region64: #{tpu_custom_call.1} parent=43 // pred_fallthru
          _
        %s413 = sand.u32 %s178, 1
        %s414 = scalar_lea.sflag [#allocation13], %s413
        %s415 = sand.u32 %s178, 1
        %s416 = smul.addr %s415, 16
        %s417 = scalar_lea.vmem [#allocation12], %s416
        // Predicated region
        $region65: #{tpu_custom_call.1} parent=43 // pred_check
          %p418 = pneg %p191
        $region66: #{tpu_custom_call.1} parent=43 // pred_check_branch
          %420 = sbr.rel (%p418) target = $region68
        $region67: #{tpu_custom_call.1} parent=43 // pred_region
          %422 = dma.done %s414, 256
        $region68: #{tpu_custom_call.1} parent=43 // pred_fallthru
          _
        %p423 = pneg %p61
        %p424 = pneg %p58
        %s425 = sand.u32 %s28, 1
        %s426 = scalar_lea.sflag [#allocation7], %s425
        %s427 = sand.u32 %s74, 1
        %s428 = smul.addr %s427, 192
        %s429 = scalar_lea.vmem [#allocation6], %s428
        %p430 = pneg %p87
        %p431 = pneg %p84
        %s432 = sand.u32 %s28, 1
        %s433 = scalar_lea.sflag [#allocation7], %s432
        %s434 = sand.u32 %s100, 1
        %s435 = smul.addr %s434, 64
        %s436 = scalar_lea.vmem [#allocation8], %s435
        %p437 = pneg %p113
        %p438 = pneg %p110
        %s439 = sand.u32 %s28, 1
        %s440 = scalar_lea.sflag [#allocation10], %s439
        %s441 = sand.u32 %s126, 1
        %s442 = smul.addr %s441, 128
        %s443 = scalar_lea.vmem [#allocation9], %s442
        %p444 = pneg %p139
        %p445 = pneg %p136
        %s446 = sand.u32 %s28, 1
        %s447 = scalar_lea.sflag [#allocation10], %s446
        %s448 = sand.u32 %s152, 1
        %s449 = smul.addr %s448, 128
        %s450 = scalar_lea.vmem [#allocation11], %s449
        %p451 = pneg %p165
        %p452 = pneg %p162
        %s453 = sand.u32 %s178, 1
        %s454 = scalar_lea.sflag [#allocation13], %s453
        %s455 = sand.u32 %s178, 1
        %s456 = smul.addr %s455, 16
        %s457 = scalar_lea.vmem [#allocation12], %s456
        %p458 = pneg %p191
        %p459 = pneg %p188
        %p460 = pneg %p217
        %p461 = pneg %p214
        %s462 = smul.u32 4, %s32
        %s463 = smul.u32 4, %s32
        %p465 = scmp.eq.s32.totalorder %s33, 0
        // Predicated region
        $region69: #{tpu_custom_call.1} parent=43 // pred_check
          %p466 = pneg %p465
        $region70: #{tpu_custom_call.1} parent=43 // pred_check_branch
          %468 = sbr.rel (%p466) target = $region72
        $region71: #{tpu_custom_call.1} parent=43 // pred_region
          %v469 = vld [vmem:[#allocation3] sm:$0xff]
          %v470 = vld [vmem:[#allocation3 + $0x8] sm:$0xff]
          %v471 = vld [vmem:[#allocation3 + $0x10] sm:$0xff]
          %v472 = vld [vmem:[#allocation3 + $0x18] sm:$0xff]
          %473 = vst [vmem:[#allocation2] sm:$0xff] %v469
          %474 = vst [vmem:[#allocation2 + $0x8] sm:$0xff] %v470
          %475 = vst [vmem:[#allocation2 + $0x10] sm:$0xff] %v471
          %476 = vst [vmem:[#allocation2 + $0x18] sm:$0xff] %v472
        $region72: #{tpu_custom_call.1} parent=43 // pred_fallthru
          _
        %v477 = vld [vmem:[#allocation2] sm:$0xff]
        %v478 = vld [vmem:[#allocation2 + $0x8] sm:$0xff]
        %v479 = vld [vmem:[#allocation2 + $0x10] sm:$0xff]
        %v480 = vld [vmem:[#allocation2 + $0x18] sm:$0xff]
        %v481 = vpack.c.bf16 %v478, %v477
        %v482 = vpack.c.bf16 %v480, %v479
        %v483 = vld [vmem:[%s417] sm:$0xff]
        %v484 = vld [vmem:[%s417 + $0x8] sm:$0xff]
        %v485 = vld [vmem:[%s377] sm:$0xff]
        %v486 = vld [vmem:[%s377 + $0x8] sm:$0xf]
        %v487 = vld [vmem:[%s377 + $0xc] sm:$0xff]
        %v488 = vld [vmem:[%s377 + $0x14] sm:$0xf]
        %v489 = vld [vmem:[%s377 + $0x18] sm:$0xff]
        %v490 = vld [vmem:[%s377 + $0x20] sm:$0xf]
        %v491 = vld [vmem:[%s377 + $0x24] sm:$0xff]
        %v492 = vld [vmem:[%s377 + $0x2c] sm:$0xf]
        %v493 = vld [vmem:[%s377 + $0x30] sm:$0xff]
        %v494 = vld [vmem:[%s377 + $0x38] sm:$0xf]
        %v495 = vld [vmem:[%s377 + $0x3c] sm:$0xff]
        %v496 = vld [vmem:[%s377 + $0x44] sm:$0xf]
        %v497 = vld [vmem:[%s377 + $0x48] sm:$0xff]
        %v498 = vld [vmem:[%s377 + $0x50] sm:$0xf]
        %v499 = vld [vmem:[%s377 + $0x54] sm:$0xff]
        %v500 = vld [vmem:[%s377 + $0x5c] sm:$0xf]
        %v501 = vld [vmem:[%s377 + $0x60] sm:$0xff]
        %v502 = vld [vmem:[%s377 + $0x68] sm:$0xf]
        %v503 = vld [vmem:[%s377 + $0x6c] sm:$0xff]
        %v504 = vld [vmem:[%s377 + $0x74] sm:$0xf]
        %v505 = vld [vmem:[%s377 + $0x78] sm:$0xff]
        %v506 = vld [vmem:[%s377 + $0x80] sm:$0xf]
        %v507 = vld [vmem:[%s377 + $0x84] sm:$0xff]
        %v508 = vld [vmem:[%s377 + $0x8c] sm:$0xf]
        %v509 = vld [vmem:[%s377 + $0x90] sm:$0xff]
        %v510 = vld [vmem:[%s377 + $0x98] sm:$0xf]
        %v511 = vld [vmem:[%s377 + $0x9c] sm:$0xff]
        %v512 = vld [vmem:[%s377 + $0xa4] sm:$0xf]
        %v513 = vld [vmem:[%s377 + $0xa8] sm:$0xff]
        %v514 = vld [vmem:[%s377 + $0xb0] sm:$0xf]
        %v515 = vld [vmem:[%s377 + $0xb4] sm:$0xff]
        %v516 = vld [vmem:[%s377 + $0xbc] sm:$0xf]
        %v549 = vunpack.c.l.b16 %v485
        %v550 = vunpack.c.h.b16 %v485
        %v551 = vunpack.c.l.b16 %v486
        %v552 = vunpack.c.l.b16 %v487
        %v553 = vunpack.c.h.b16 %v487
        %v554 = vunpack.c.l.b16 %v488
        %v555 = vunpack.c.l.b16 %v489
        %v556 = vunpack.c.h.b16 %v489
        %v557 = vunpack.c.l.b16 %v490
        %v558 = vunpack.c.l.b16 %v491
        %v559 = vunpack.c.h.b16 %v491
        %v560 = vunpack.c.l.b16 %v492
        %v561 = vunpack.c.l.b16 %v493
        %v562 = vunpack.c.h.b16 %v493
        %v563 = vunpack.c.l.b16 %v494
        %v564 = vunpack.c.l.b16 %v495
        %v565 = vunpack.c.h.b16 %v495
        %v566 = vunpack.c.l.b16 %v496
        %v567 = vunpack.c.l.b16 %v497
        %v568 = vunpack.c.h.b16 %v497
        %v569 = vunpack.c.l.b16 %v498
        %v570 = vunpack.c.l.b16 %v499
        %v571 = vunpack.c.h.b16 %v499
        %v572 = vunpack.c.l.b16 %v500
        %v573 = vunpack.c.l.b16 %v501
        %v574 = vunpack.c.h.b16 %v501
        %v575 = vunpack.c.l.b16 %v502
        %v576 = vunpack.c.l.b16 %v503
        %v577 = vunpack.c.h.b16 %v503
        %v578 = vunpack.c.l.b16 %v504
        %v579 = vunpack.c.l.b16 %v505
        %v580 = vunpack.c.h.b16 %v505
        %v581 = vunpack.c.l.b16 %v506
        %v582 = vunpack.c.l.b16 %v507
        %v583 = vunpack.c.h.b16 %v507
        %v584 = vunpack.c.l.b16 %v508
        %v585 = vunpack.c.l.b16 %v509
        %v586 = vunpack.c.h.b16 %v509
        %v587 = vunpack.c.l.b16 %v510
        %v588 = vunpack.c.l.b16 %v511
        %v589 = vunpack.c.h.b16 %v511
        %v590 = vunpack.c.l.b16 %v512
        %v591 = vunpack.c.l.b16 %v513
        %v592 = vunpack.c.h.b16 %v513
        %v593 = vunpack.c.l.b16 %v514
        %v594 = vunpack.c.l.b16 %v515
        %v595 = vunpack.c.h.b16 %v515
        %v596 = vunpack.c.l.b16 %v516
        %v597 = vpack.c.b16 %v552, %v549
        %v598 = vpack.c.b16 %v553, %v550
        %v599 = vpack.c.b16 %v554, %v551
        %v600 = vpack.c.b16 %v558, %v555
        %v601 = vpack.c.b16 %v559, %v556
        %v602 = vpack.c.b16 %v560, %v557
        %v603 = vpack.c.b16 %v564, %v561
        %v604 = vpack.c.b16 %v565, %v562
        %v605 = vpack.c.b16 %v566, %v563
        %v606 = vpack.c.b16 %v570, %v567
        %v607 = vpack.c.b16 %v571, %v568
        %v608 = vpack.c.b16 %v572, %v569
        %v609 = vpack.c.b16 %v576, %v573
        %v610 = vpack.c.b16 %v577, %v574
        %v611 = vpack.c.b16 %v578, %v575
        %v612 = vpack.c.b16 %v582, %v579
        %v613 = vpack.c.b16 %v583, %v580
        %v614 = vpack.c.b16 %v584, %v581
        %v615 = vpack.c.b16 %v588, %v585
        %v616 = vpack.c.b16 %v589, %v586
        %v617 = vpack.c.b16 %v590, %v587
        %v618 = vpack.c.b16 %v594, %v591
        %v619 = vpack.c.b16 %v595, %v592
        %v620 = vpack.c.b16 %v596, %v593
        %645 = vmatpush.bf16.msra.mxu0 %v618
        %646 = vmatpush.bf16.msra.mxu0 %v615
        %647 = vmatpush.bf16.msra.mxu0 %v612
        %648 = vmatpush.bf16.msra.mxu0 %v609
        %649 = vmatpush.bf16.msra.mxu0 %v606
        %650 = vmatpush.bf16.msra.mxu0 %v603
        %651 = vmatpush.bf16.msra.mxu0 %v600
        %652 = vmatpush.bf16.msra.mxu0 %v597
        %653 = vmatmul.bf16.gmra.mxu0 %v481
        %v654 = vpop.f32.mrf.mxu0
        %v655 = vadd.f32 0.0, %v654
        %v656 = vpop.f32.mrf.mxu0
        %v657 = vadd.f32 0.0, %v656
        %658 = vmatmul.bf16.gmra.mxu0 %v482
        %v659 = vpop.f32.mrf.mxu0
        %v660 = vadd.f32 0.0, %v659
        %v661 = vpop.f32.mrf.mxu0
        %v662 = vadd.f32 0.0, %v661
        %663 = vdwg.mxu0
        %664 = vmatpush.bf16.msra.mxu0 %v619
        %665 = vmatpush.bf16.msra.mxu0 %v616
        %666 = vmatpush.bf16.msra.mxu0 %v613
        %667 = vmatpush.bf16.msra.mxu0 %v610
        %668 = vmatpush.bf16.msra.mxu0 %v607
        %669 = vmatpush.bf16.msra.mxu0 %v604
        %670 = vmatpush.bf16.msra.mxu0 %v601
        %671 = vmatpush.bf16.msra.mxu0 %v598
        %672 = vmatmul.bf16.gmra.mxu0 %v481
        %v673 = vpop.f32.mrf.mxu0
        %v674 = vadd.f32 0.0, %v673
        %v675 = vpop.f32.mrf.mxu0
        %v676 = vadd.f32 0.0, %v675
        %677 = vmatmul.bf16.gmra.mxu0 %v482
        %v678 = vpop.f32.mrf.mxu0
        %v679 = vadd.f32 0.0, %v678
        %v680 = vpop.f32.mrf.mxu0
        %v681 = vadd.f32 0.0, %v680
        %682 = vdwg.mxu0
        %683 = vmatpush.bf16.msra.mxu0 %v620
        %684 = vmatpush.bf16.msra.mxu0 %v617
        %685 = vmatpush.bf16.msra.mxu0 %v614
        %686 = vmatpush.bf16.msra.mxu0 %v611
        %687 = vmatpush.bf16.msra.mxu0 %v608
        %688 = vmatpush.bf16.msra.mxu0 %v605
        %689 = vmatpush.bf16.msra.mxu0 %v602
        %690 = vmatpush.bf16.msra.mxu0 %v599
        %691 = vmatmul.bf16.gmra.mxu0 %v481
        %v692 = vpop.f32.mrf.mxu0
        %v693 = vadd.f32 0.0, %v692
        %v694 = vpop.f32.mrf.mxu0
        %v695 = vadd.f32 0.0, %v694
        %696 = vmatmul.bf16.gmra.mxu0 %v482
        %v697 = vpop.f32.mrf.mxu0
        %v698 = vadd.f32 0.0, %v697
        %v699 = vpop.f32.mrf.mxu0
        %v700 = vadd.f32 0.0, %v699
        %701 = vdwg.mxu0
        %v702 = vlaneseq
        %v703 = vshrl.u32 %v702, 7
        %v704 = vadd.s32 %v703, 8
        %v705 = vlaneseq
        %v706 = vand.u32 %v705, 127
        %vm707 = vcmp.gt.s32.totalorder %v706, %v703
        %vm708 = vcmp.gt.s32.totalorder %v706, %v704
        %v709 = vsel %vm707, -1e+30, 0.0
        %v710 = vsel %vm708, -1e+30, 0.0
        %v711 = vpack.c.bf16 %v655, %v655
        %v712 = vpack.c.bf16 %v657, %v657
        %v713 = vpack.c.bf16 %v660, %v660
        %v714 = vpack.c.bf16 %v662, %v662
        %v715 = vpack.c.bf16 %v674, %v674
        %v716 = vpack.c.bf16 %v676, %v676
        %v717 = vpack.c.bf16 %v679, %v679
        %v718 = vpack.c.bf16 %v681, %v681
        %v719 = vpack.c.bf16 %v693, %v693
        %v720 = vpack.c.bf16 %v695, %v695
        %v721 = vpack.c.bf16 %v698, %v698
        %v722 = vpack.c.bf16 %v700, %v700
        %v725 = vunpack.c.l.b16 %v711
        %v726 = vunpack.c.l.b16 %v712
        %v727 = vpack.c.b16 %v726, %v725
        %v730 = vunpack.c.l.b16 %v715
        %v731 = vunpack.c.l.b16 %v716
        %v732 = vpack.c.b16 %v731, %v730
        %vm733 = vcmask 261120
        %v735 = vsel %vm733, %v727, 0
        %v738 = vsel %vm733, %v732, 0
        %740 = vmatpush.bf16.xpose.msra.mxu0 0
        %741 = vmatpush.bf16.xpose.msra.mxu0 0
        %742 = vmatpush.bf16.xpose.msra.mxu0 0
        %743 = vmatpush.bf16.xpose.msra.mxu0 0
        %744 = vmatpush.bf16.xpose.msra.mxu0 0
        %745 = vmatpush.bf16.xpose.msra.mxu0 0
        %746 = vmatpush.bf16.xpose.msra.mxu0 0
        %747 = vmatpush.bf16.xpose.msra.mxu0 %v738
        %748 = vmatmul.bf16.gmra.mxu0 %v735
        %v749 = vpop.f32.mrf.mxu0
        %v750 = vadd.f32 0.0, %v749
        %v751 = vpop.f32.mrf.mxu0
        %v752 = vadd.f32 0.0, %v751
        %753 = vdwg.mxu0
        %v756 = vunpack.c.l.b16 %v713
        %v757 = vunpack.c.l.b16 %v714
        %v758 = vpack.c.b16 %v757, %v756
        %v761 = vunpack.c.l.b16 %v717
        %v762 = vunpack.c.l.b16 %v718
        %v763 = vpack.c.b16 %v762, %v761
        %v765 = vsel %vm733, %v758, 0
        %v768 = vsel %vm733, %v763, 0
        %770 = vmatpush.bf16.xpose.msra.mxu0 0
        %771 = vmatpush.bf16.xpose.msra.mxu0 0
        %772 = vmatpush.bf16.xpose.msra.mxu0 0
        %773 = vmatpush.bf16.xpose.msra.mxu0 0
        %774 = vmatpush.bf16.xpose.msra.mxu0 0
        %775 = vmatpush.bf16.xpose.msra.mxu0 0
        %776 = vmatpush.bf16.xpose.msra.mxu0 0
        %777 = vmatpush.bf16.xpose.msra.mxu0 %v768
        %778 = vmatmul.bf16.gmra.mxu0 %v765
        %v779 = vpop.f32.mrf.mxu0
        %v780 = vadd.f32 0.0, %v779
        %v781 = vpop.f32.mrf.mxu0
        %v782 = vadd.f32 0.0, %v781
        %783 = vdwg.mxu0
        %v784 = vmul.f32 %v750, 0.17677669
        %v785 = vmul.f32 %v752, 0.17677669
        %v786 = vmul.f32 %v780, 0.17677669
        %v787 = vmul.f32 %v782, 0.17677669
        %v788 = vadd.f32 %v784, %v709
        %v789 = vadd.f32 %v785, %v710
        %v790 = vadd.f32 %v786, %v709
        %v791 = vadd.f32 %v787, %v710
        %vm792 = vcmask 130048
        %v793 = vsel %vm792, %v788, -inf
        %794 = vmax.xlane.f32.xlu0 %v793
        %v795 = vpop.xlane.xlu0 %794
        %v796 = vsel %vm792, %v789, -inf
        %797 = vmax.xlane.f32.xlu0 %v796
        %v798 = vpop.xlane.xlu0 %797
        %v799 = vsel %vm792, %v790, -inf
        %800 = vmax.xlane.f32.xlu0 %v799
        %v801 = vpop.xlane.xlu0 %800
        %v802 = vsel %vm792, %v791, -inf
        %803 = vmax.xlane.f32.xlu0 %v802
        %v804 = vpop.xlane.xlu0 %803
        %v805 = vsub.f32 %v788, %v795
        %v806 = vsub.f32 %v789, %v798
        %v807 = vsub.f32 %v790, %v801
        %v808 = vsub.f32 %v791, %v804
        %v809 = vmul.f32 %v805, 1.442695
        %v810 = vpow.pop %v809
        %v811 = vmul.f32 %v806, 1.442695
        %v812 = vpow.pop %v811
        %v813 = vmul.f32 %v807, 1.442695
        %v814 = vpow.pop %v813
        %v815 = vmul.f32 %v808, 1.442695
        %v816 = vpow.pop %v815
        %v817 = vsel %vm792, %v810, 0.0
        %818 = vadd.xlane.f32.xlu0 %v817
        %v819 = vpop.xlane.xlu0 %818
        %v820 = vsel %vm792, %v812, 0.0
        %821 = vadd.xlane.f32.xlu0 %v820
        %v822 = vpop.xlane.xlu0 %821
        %v823 = vsel %vm792, %v814, 0.0
        %824 = vadd.xlane.f32.xlu0 %v823
        %v825 = vpop.xlane.xlu0 %824
        %v826 = vsel %vm792, %v816, 0.0
        %827 = vadd.xlane.f32.xlu0 %v826
        %v828 = vpop.xlane.xlu0 %827
        %v829 = vrcp.pop %v819
        %v830 = vrcp.pop %v822
        %v831 = vrcp.pop %v825
        %v832 = vrcp.pop %v828
        %v833 = vmul.f32 %v810, %v829
        %v834 = vmul.f32 %v812, %v830
        %v835 = vmul.f32 %v814, %v831
        %v836 = vmul.f32 %v816, %v832
        %v837 = vpack.c.bf16 %v833, %v833
        %v838 = vpack.c.bf16 %v834, %v834
        %v839 = vpack.c.bf16 %v835, %v835
        %v840 = vpack.c.bf16 %v836, %v836
        %v843 = vunpack.c.l.b16 %v837
        %v844 = vunpack.c.l.b16 %v838
        %v845 = vpack.c.b16 %v844, %v843
        %v848 = vunpack.c.l.b16 %v719
        %v849 = vunpack.c.l.b16 %v720
        %v850 = vpack.c.b16 %v849, %v848
        %v853 = vsel %vm792, %v845, 0
        %855 = vmatpush.bf16.msra.mxu0 0
        %856 = vmatpush.bf16.msra.mxu0 0
        %857 = vmatpush.bf16.msra.mxu0 0
        %858 = vmatpush.bf16.msra.mxu0 0
        %859 = vmatpush.bf16.msra.mxu0 0
        %860 = vmatpush.bf16.msra.mxu0 0
        %861 = vmatpush.bf16.msra.mxu0 0
        %862 = vmatpush.bf16.msra.mxu0 %v850
        %863 = vmatmul.bf16.gmra.mxu0 %v853
        %v864 = vpop.f32.mrf.mxu0
        %v865 = vadd.f32 0.0, %v864
        %v866 = vpop.f32.mrf.mxu0
        %v867 = vadd.f32 0.0, %v866
        %868 = vdwg.mxu0
        %v871 = vunpack.c.l.b16 %v839
        %v872 = vunpack.c.l.b16 %v840
        %v873 = vpack.c.b16 %v872, %v871
        %v876 = vunpack.c.l.b16 %v721
        %v877 = vunpack.c.l.b16 %v722
        %v878 = vpack.c.b16 %v877, %v876
        %v881 = vsel %vm792, %v873, 0
        %883 = vmatpush.bf16.msra.mxu0 0
        %884 = vmatpush.bf16.msra.mxu0 0
        %885 = vmatpush.bf16.msra.mxu0 0
        %886 = vmatpush.bf16.msra.mxu0 0
        %887 = vmatpush.bf16.msra.mxu0 0
        %888 = vmatpush.bf16.msra.mxu0 0
        %889 = vmatpush.bf16.msra.mxu0 0
        %890 = vmatpush.bf16.msra.mxu0 %v878
        %891 = vmatmul.bf16.gmra.mxu0 %v881
        %v892 = vpop.f32.mrf.mxu0
        %v893 = vadd.f32 0.0, %v892
        %v894 = vpop.f32.mrf.mxu0
        %v895 = vadd.f32 0.0, %v894
        %896 = vdwg.mxu0
        %897 = vrot.lane.b32.xlu0 %v727, 96
        %v898 = vpop.permute.xlu0 %897
        %899 = vrot.lane.b32.xlu0 %v732, 96
        %v900 = vpop.permute.xlu0 %899
        %v902 = vsel %vm733, %v898, 0
        %v905 = vsel %vm733, %v900, 0
        %907 = vmatpush.bf16.xpose.msra.mxu0 0
        %908 = vmatpush.bf16.xpose.msra.mxu0 0
        %909 = vmatpush.bf16.xpose.msra.mxu0 0
        %910 = vmatpush.bf16.xpose.msra.mxu0 0
        %911 = vmatpush.bf16.xpose.msra.mxu0 0
        %912 = vmatpush.bf16.xpose.msra.mxu0 0
        %913 = vmatpush.bf16.xpose.msra.mxu0 0
        %914 = vmatpush.bf16.xpose.msra.mxu0 %v905
        %915 = vmatmul.bf16.gmra.mxu0 %v902
        %v916 = vpop.f32.mrf.mxu0
        %v917 = vadd.f32 0.0, %v916
        %v918 = vpop.f32.mrf.mxu0
        %v919 = vadd.f32 0.0, %v918
        %920 = vdwg.mxu0
        %921 = vrot.lane.b32.xlu0 %v758, 96
        %v922 = vpop.permute.xlu0 %921
        %923 = vrot.lane.b32.xlu0 %v763, 96
        %v924 = vpop.permute.xlu0 %923
        %v926 = vsel %vm733, %v922, 0
        %v929 = vsel %vm733, %v924, 0
        %931 = vmatpush.bf16.xpose.msra.mxu0 0
        %932 = vmatpush.bf16.xpose.msra.mxu0 0
        %933 = vmatpush.bf16.xpose.msra.mxu0 0
        %934 = vmatpush.bf16.xpose.msra.mxu0 0
        %935 = vmatpush.bf16.xpose.msra.mxu0 0
        %936 = vmatpush.bf16.xpose.msra.mxu0 0
        %937 = vmatpush.bf16.xpose.msra.mxu0 0
        %938 = vmatpush.bf16.xpose.msra.mxu0 %v929
        %939 = vmatmul.bf16.gmra.mxu0 %v926
        %v940 = vpop.f32.mrf.mxu0
        %v941 = vadd.f32 0.0, %v940
        %v942 = vpop.f32.mrf.mxu0
        %v943 = vadd.f32 0.0, %v942
        %944 = vdwg.mxu0
        %v945 = vmul.f32 %v917, 0.17677669
        %v946 = vmul.f32 %v919, 0.17677669
        %v947 = vmul.f32 %v941, 0.17677669
        %v948 = vmul.f32 %v943, 0.17677669
        %v949 = vadd.f32 %v945, %v709
        %v950 = vadd.f32 %v946, %v710
        %v951 = vadd.f32 %v947, %v709
        %v952 = vadd.f32 %v948, %v710
        %v953 = vsel %vm792, %v949, -inf
        %954 = vmax.xlane.f32.xlu0 %v953
        %v955 = vpop.xlane.xlu0 %954
        %v956 = vsel %vm792, %v950, -inf
        %957 = vmax.xlane.f32.xlu0 %v956
        %v958 = vpop.xlane.xlu0 %957
        %v959 = vsel %vm792, %v951, -inf
        %960 = vmax.xlane.f32.xlu0 %v959
        %v961 = vpop.xlane.xlu0 %960
        %v962 = vsel %vm792, %v952, -inf
        %963 = vmax.xlane.f32.xlu0 %v962
        %v964 = vpop.xlane.xlu0 %963
        %v965 = vsub.f32 %v949, %v955
        %v966 = vsub.f32 %v950, %v958
        %v967 = vsub.f32 %v951, %v961
        %v968 = vsub.f32 %v952, %v964
        %v969 = vmul.f32 %v965, 1.442695
        %v970 = vpow.pop %v969
        %v971 = vmul.f32 %v966, 1.442695
        %v972 = vpow.pop %v971
        %v973 = vmul.f32 %v967, 1.442695
        %v974 = vpow.pop %v973
        %v975 = vmul.f32 %v968, 1.442695
        %v976 = vpow.pop %v975
        %v977 = vsel %vm792, %v970, 0.0
        %978 = vadd.xlane.f32.xlu0 %v977
        %v979 = vpop.xlane.xlu0 %978
        %v980 = vsel %vm792, %v972, 0.0
        %981 = vadd.xlane.f32.xlu0 %v980
        %v982 = vpop.xlane.xlu0 %981
        %v983 = vsel %vm792, %v974, 0.0
        %984 = vadd.xlane.f32.xlu0 %v983
        %v985 = vpop.xlane.xlu0 %984
        %v986 = vsel %vm792, %v976, 0.0
        %987 = vadd.xlane.f32.xlu0 %v986
        %v988 = vpop.xlane.xlu0 %987
        %v989 = vrcp.pop %v979
        %v990 = vrcp.pop %v982
        %v991 = vrcp.pop %v985
        %v992 = vrcp.pop %v988
        %v993 = vmul.f32 %v970, %v989
        %v994 = vmul.f32 %v972, %v990
        %v995 = vmul.f32 %v974, %v991
        %v996 = vmul.f32 %v976, %v992
        %v997 = vpack.c.bf16 %v993, %v993
        %v998 = vpack.c.bf16 %v994, %v994
        %v999 = vpack.c.bf16 %v995, %v995
        %v1000 = vpack.c.bf16 %v996, %v996
        %v1003 = vunpack.c.l.b16 %v997
        %v1004 = vunpack.c.l.b16 %v998
        %v1005 = vpack.c.b16 %v1004, %v1003
        %1006 = vrot.lane.b32.xlu0 %v850, 96
        %v1007 = vpop.permute.xlu0 %1006
        %v1010 = vsel %vm792, %v1005, 0
        %1012 = vmatpush.bf16.msra.mxu0 0
        %1013 = vmatpush.bf16.msra.mxu0 0
        %1014 = vmatpush.bf16.msra.mxu0 0
        %1015 = vmatpush.bf16.msra.mxu0 0
        %1016 = vmatpush.bf16.msra.mxu0 0
        %1017 = vmatpush.bf16.msra.mxu0 0
        %1018 = vmatpush.bf16.msra.mxu0 0
        %1019 = vmatpush.bf16.msra.mxu0 %v1007
        %1020 = vmatmul.bf16.gmra.mxu0 %v1010
        %v1021 = vpop.f32.mrf.mxu0
        %v1022 = vadd.f32 0.0, %v1021
        %v1023 = vpop.f32.mrf.mxu0
        %v1024 = vadd.f32 0.0, %v1023
        %1025 = vdwg.mxu0
        %v1028 = vunpack.c.l.b16 %v999
        %v1029 = vunpack.c.l.b16 %v1000
        %v1030 = vpack.c.b16 %v1029, %v1028
        %1031 = vrot.lane.b32.xlu0 %v878, 96
        %v1032 = vpop.permute.xlu0 %1031
        %v1035 = vsel %vm792, %v1030, 0
        %1037 = vmatpush.bf16.msra.mxu0 0
        %1038 = vmatpush.bf16.msra.mxu0 0
        %1039 = vmatpush.bf16.msra.mxu0 0
        %1040 = vmatpush.bf16.msra.mxu0 0
        %1041 = vmatpush.bf16.msra.mxu0 0
        %1042 = vmatpush.bf16.msra.mxu0 0
        %1043 = vmatpush.bf16.msra.mxu0 0
        %1044 = vmatpush.bf16.msra.mxu0 %v1032
        %1045 = vmatmul.bf16.gmra.mxu0 %v1035
        %v1046 = vpop.f32.mrf.mxu0
        %v1047 = vadd.f32 0.0, %v1046
        %v1048 = vpop.f32.mrf.mxu0
        %v1049 = vadd.f32 0.0, %v1048
        %1050 = vdwg.mxu0
        %1051 = vrot.lane.b32.xlu0 %v727, 64
        %v1052 = vpop.permute.xlu0 %1051
        %1053 = vrot.lane.b32.xlu0 %v732, 64
        %v1054 = vpop.permute.xlu0 %1053
        %v1056 = vsel %vm733, %v1052, 0
        %v1059 = vsel %vm733, %v1054, 0
        %1061 = vmatpush.bf16.xpose.msra.mxu0 0
        %1062 = vmatpush.bf16.xpose.msra.mxu0 0
        %1063 = vmatpush.bf16.xpose.msra.mxu0 0
        %1064 = vmatpush.bf16.xpose.msra.mxu0 0
        %1065 = vmatpush.bf16.xpose.msra.mxu0 0
        %1066 = vmatpush.bf16.xpose.msra.mxu0 0
        %1067 = vmatpush.bf16.xpose.msra.mxu0 0
        %1068 = vmatpush.bf16.xpose.msra.mxu0 %v1059
        %1069 = vmatmul.bf16.gmra.mxu0 %v1056
        %v1070 = vpop.f32.mrf.mxu0
        %v1071 = vadd.f32 0.0, %v1070
        %v1072 = vpop.f32.mrf.mxu0
        %v1073 = vadd.f32 0.0, %v1072
        %1074 = vdwg.mxu0
        %1075 = vrot.lane.b32.xlu0 %v758, 64
        %v1076 = vpop.permute.xlu0 %1075
        %1077 = vrot.lane.b32.xlu0 %v763, 64
        %v1078 = vpop.permute.xlu0 %1077
        %v1080 = vsel %vm733, %v1076, 0
        %v1083 = vsel %vm733, %v1078, 0
        %1085 = vmatpush.bf16.xpose.msra.mxu0 0
        %1086 = vmatpush.bf16.xpose.msra.mxu0 0
        %1087 = vmatpush.bf16.xpose.msra.mxu0 0
        %1088 = vmatpush.bf16.xpose.msra.mxu0 0
        %1089 = vmatpush.bf16.xpose.msra.mxu0 0
        %1090 = vmatpush.bf16.xpose.msra.mxu0 0
        %1091 = vmatpush.bf16.xpose.msra.mxu0 0
        %1092 = vmatpush.bf16.xpose.msra.mxu0 %v1083
        %1093 = vmatmul.bf16.gmra.mxu0 %v1080
        %v1094 = vpop.f32.mrf.mxu0
        %v1095 = vadd.f32 0.0, %v1094
        %v1096 = vpop.f32.mrf.mxu0
        %v1097 = vadd.f32 0.0, %v1096
        %1098 = vdwg.mxu0
        %v1099 = vmul.f32 %v1071, 0.17677669
        %v1100 = vmul.f32 %v1073, 0.17677669
        %v1101 = vmul.f32 %v1095, 0.17677669
        %v1102 = vmul.f32 %v1097, 0.17677669
        %v1103 = vadd.f32 %v1099, %v709
        %v1104 = vadd.f32 %v1100, %v710
        %v1105 = vadd.f32 %v1101, %v709
        %v1106 = vadd.f32 %v1102, %v710
        %v1107 = vsel %vm792, %v1103, -inf
        %1108 = vmax.xlane.f32.xlu0 %v1107
        %v1109 = vpop.xlane.xlu0 %1108
        %v1110 = vsel %vm792, %v1104, -inf
        %1111 = vmax.xlane.f32.xlu0 %v1110
        %v1112 = vpop.xlane.xlu0 %1111
        %v1113 = vsel %vm792, %v1105, -inf
        %1114 = vmax.xlane.f32.xlu0 %v1113
        %v1115 = vpop.xlane.xlu0 %1114
        %v1116 = vsel %vm792, %v1106, -inf
        %1117 = vmax.xlane.f32.xlu0 %v1116
        %v1118 = vpop.xlane.xlu0 %1117
        %v1119 = vsub.f32 %v1103, %v1109
        %v1120 = vsub.f32 %v1104, %v1112
        %v1121 = vsub.f32 %v1105, %v1115
        %v1122 = vsub.f32 %v1106, %v1118
        %v1123 = vmul.f32 %v1119, 1.442695
        %v1124 = vpow.pop %v1123
        %v1125 = vmul.f32 %v1120, 1.442695
        %v1126 = vpow.pop %v1125
        %v1127 = vmul.f32 %v1121, 1.442695
        %v1128 = vpow.pop %v1127
        %v1129 = vmul.f32 %v1122, 1.442695
        %v1130 = vpow.pop %v1129
        %v1131 = vsel %vm792, %v1124, 0.0
        %1132 = vadd.xlane.f32.xlu0 %v1131
        %v1133 = vpop.xlane.xlu0 %1132
        %v1134 = vsel %vm792, %v1126, 0.0
        %1135 = vadd.xlane.f32.xlu0 %v1134
        %v1136 = vpop.xlane.xlu0 %1135
        %v1137 = vsel %vm792, %v1128, 0.0
        %1138 = vadd.xlane.f32.xlu0 %v1137
        %v1139 = vpop.xlane.xlu0 %1138
        %v1140 = vsel %vm792, %v1130, 0.0
        %1141 = vadd.xlane.f32.xlu0 %v1140
        %v1142 = vpop.xlane.xlu0 %1141
        %v1143 = vrcp.pop %v1133
        %v1144 = vrcp.pop %v1136
        %v1145 = vrcp.pop %v1139
        %v1146 = vrcp.pop %v1142
        %v1147 = vmul.f32 %v1124, %v1143
        %v1148 = vmul.f32 %v1126, %v1144
        %v1149 = vmul.f32 %v1128, %v1145
        %v1150 = vmul.f32 %v1130, %v1146
        %v1151 = vpack.c.bf16 %v1147, %v1147
        %v1152 = vpack.c.bf16 %v1148, %v1148
        %v1153 = vpack.c.bf16 %v1149, %v1149
        %v1154 = vpack.c.bf16 %v1150, %v1150
        %v1157 = vunpack.c.l.b16 %v1151
        %v1158 = vunpack.c.l.b16 %v1152
        %v1159 = vpack.c.b16 %v1158, %v1157
        %1160 = vrot.lane.b32.xlu0 %v850, 64
        %v1161 = vpop.permute.xlu0 %1160
        %v1164 = vsel %vm792, %v1159, 0
        %1166 = vmatpush.bf16.msra.mxu0 0
        %1167 = vmatpush.bf16.msra.mxu0 0
        %1168 = vmatpush.bf16.msra.mxu0 0
        %1169 = vmatpush.bf16.msra.mxu0 0
        %1170 = vmatpush.bf16.msra.mxu0 0
        %1171 = vmatpush.bf16.msra.mxu0 0
        %1172 = vmatpush.bf16.msra.mxu0 0
        %1173 = vmatpush.bf16.msra.mxu0 %v1161
        %1174 = vmatmul.bf16.gmra.mxu0 %v1164
        %v1175 = vpop.f32.mrf.mxu0
        %v1176 = vadd.f32 0.0, %v1175
        %v1177 = vpop.f32.mrf.mxu0
        %v1178 = vadd.f32 0.0, %v1177
        %1179 = vdwg.mxu0
        %v1182 = vunpack.c.l.b16 %v1153
        %v1183 = vunpack.c.l.b16 %v1154
        %v1184 = vpack.c.b16 %v1183, %v1182
        %1185 = vrot.lane.b32.xlu0 %v878, 64
        %v1186 = vpop.permute.xlu0 %1185
        %v1189 = vsel %vm792, %v1184, 0
        %1191 = vmatpush.bf16.msra.mxu0 0
        %1192 = vmatpush.bf16.msra.mxu0 0
        %1193 = vmatpush.bf16.msra.mxu0 0
        %1194 = vmatpush.bf16.msra.mxu0 0
        %1195 = vmatpush.bf16.msra.mxu0 0
        %1196 = vmatpush.bf16.msra.mxu0 0
        %1197 = vmatpush.bf16.msra.mxu0 0
        %1198 = vmatpush.bf16.msra.mxu0 %v1186
        %1199 = vmatmul.bf16.gmra.mxu0 %v1189
        %v1200 = vpop.f32.mrf.mxu0
        %v1201 = vadd.f32 0.0, %v1200
        %v1202 = vpop.f32.mrf.mxu0
        %v1203 = vadd.f32 0.0, %v1202
        %1204 = vdwg.mxu0
        %1205 = vrot.lane.b32.xlu0 %v727, 32
        %v1206 = vpop.permute.xlu0 %1205
        %1207 = vrot.lane.b32.xlu0 %v732, 32
        %v1208 = vpop.permute.xlu0 %1207
        %v1210 = vsel %vm733, %v1206, 0
        %v1213 = vsel %vm733, %v1208, 0
        %1215 = vmatpush.bf16.xpose.msra.mxu0 0
        %1216 = vmatpush.bf16.xpose.msra.mxu0 0
        %1217 = vmatpush.bf16.xpose.msra.mxu0 0
        %1218 = vmatpush.bf16.xpose.msra.mxu0 0
        %1219 = vmatpush.bf16.xpose.msra.mxu0 0
        %1220 = vmatpush.bf16.xpose.msra.mxu0 0
        %1221 = vmatpush.bf16.xpose.msra.mxu0 0
        %1222 = vmatpush.bf16.xpose.msra.mxu0 %v1213
        %1223 = vmatmul.bf16.gmra.mxu0 %v1210
        %v1224 = vpop.f32.mrf.mxu0
        %v1225 = vadd.f32 0.0, %v1224
        %v1226 = vpop.f32.mrf.mxu0
        %v1227 = vadd.f32 0.0, %v1226
        %1228 = vdwg.mxu0
        %1229 = vrot.lane.b32.xlu0 %v758, 32
        %v1230 = vpop.permute.xlu0 %1229
        %1231 = vrot.lane.b32.xlu0 %v763, 32
        %v1232 = vpop.permute.xlu0 %1231
        %v1234 = vsel %vm733, %v1230, 0
        %v1237 = vsel %vm733, %v1232, 0
        %1239 = vmatpush.bf16.xpose.msra.mxu0 0
        %1240 = vmatpush.bf16.xpose.msra.mxu0 0
        %1241 = vmatpush.bf16.xpose.msra.mxu0 0
        %1242 = vmatpush.bf16.xpose.msra.mxu0 0
        %1243 = vmatpush.bf16.xpose.msra.mxu0 0
        %1244 = vmatpush.bf16.xpose.msra.mxu0 0
        %1245 = vmatpush.bf16.xpose.msra.mxu0 0
        %1246 = vmatpush.bf16.xpose.msra.mxu0 %v1237
        %1247 = vmatmul.bf16.gmra.mxu0 %v1234
        %v1248 = vpop.f32.mrf.mxu0
        %v1249 = vadd.f32 0.0, %v1248
        %v1250 = vpop.f32.mrf.mxu0
        %v1251 = vadd.f32 0.0, %v1250
        %1252 = vdwg.mxu0
        %v1253 = vmul.f32 %v1225, 0.17677669
        %v1254 = vmul.f32 %v1227, 0.17677669
        %v1255 = vmul.f32 %v1249, 0.17677669
        %v1256 = vmul.f32 %v1251, 0.17677669
        %v1257 = vadd.f32 %v1253, %v709
        %v1258 = vadd.f32 %v1254, %v710
        %v1259 = vadd.f32 %v1255, %v709
        %v1260 = vadd.f32 %v1256, %v710
        %v1261 = vsel %vm792, %v1257, -inf
        %1262 = vmax.xlane.f32.xlu0 %v1261
        %v1263 = vpop.xlane.xlu0 %1262
        %v1264 = vsel %vm792, %v1258, -inf
        %1265 = vmax.xlane.f32.xlu0 %v1264
        %v1266 = vpop.xlane.xlu0 %1265
        %v1267 = vsel %vm792, %v1259, -inf
        %1268 = vmax.xlane.f32.xlu0 %v1267
        %v1269 = vpop.xlane.xlu0 %1268
        %v1270 = vsel %vm792, %v1260, -inf
        %1271 = vmax.xlane.f32.xlu0 %v1270
        %v1272 = vpop.xlane.xlu0 %1271
        %v1273 = vsub.f32 %v1257, %v1263
        %v1274 = vsub.f32 %v1258, %v1266
        %v1275 = vsub.f32 %v1259, %v1269
        %v1276 = vsub.f32 %v1260, %v1272
        %v1277 = vmul.f32 %v1273, 1.442695
        %v1278 = vpow.pop %v1277
        %v1279 = vmul.f32 %v1274, 1.442695
        %v1280 = vpow.pop %v1279
        %v1281 = vmul.f32 %v1275, 1.442695
        %v1282 = vpow.pop %v1281
        %v1283 = vmul.f32 %v1276, 1.442695
        %v1284 = vpow.pop %v1283
        %v1285 = vsel %vm792, %v1278, 0.0
        %1286 = vadd.xlane.f32.xlu0 %v1285
        %v1287 = vpop.xlane.xlu0 %1286
        %v1288 = vsel %vm792, %v1280, 0.0
        %1289 = vadd.xlane.f32.xlu0 %v1288
        %v1290 = vpop.xlane.xlu0 %1289
        %v1291 = vsel %vm792, %v1282, 0.0
        %1292 = vadd.xlane.f32.xlu0 %v1291
        %v1293 = vpop.xlane.xlu0 %1292
        %v1294 = vsel %vm792, %v1284, 0.0
        %1295 = vadd.xlane.f32.xlu0 %v1294
        %v1296 = vpop.xlane.xlu0 %1295
        %v1297 = vrcp.pop %v1287
        %v1298 = vrcp.pop %v1290
        %v1299 = vrcp.pop %v1293
        %v1300 = vrcp.pop %v1296
        %v1301 = vmul.f32 %v1278, %v1297
        %v1302 = vmul.f32 %v1280, %v1298
        %v1303 = vmul.f32 %v1282, %v1299
        %v1304 = vmul.f32 %v1284, %v1300
        %v1305 = vpack.c.bf16 %v1301, %v1301
        %v1306 = vpack.c.bf16 %v1302, %v1302
        %v1307 = vpack.c.bf16 %v1303, %v1303
        %v1308 = vpack.c.bf16 %v1304, %v1304
        %v1311 = vunpack.c.l.b16 %v1305
        %v1312 = vunpack.c.l.b16 %v1306
        %v1313 = vpack.c.b16 %v1312, %v1311
        %1314 = vrot.lane.b32.xlu0 %v850, 32
        %v1315 = vpop.permute.xlu0 %1314
        %v1318 = vsel %vm792, %v1313, 0
        %1320 = vmatpush.bf16.msra.mxu0 0
        %1321 = vmatpush.bf16.msra.mxu0 0
        %1322 = vmatpush.bf16.msra.mxu0 0
        %1323 = vmatpush.bf16.msra.mxu0 0
        %1324 = vmatpush.bf16.msra.mxu0 0
        %1325 = vmatpush.bf16.msra.mxu0 0
        %1326 = vmatpush.bf16.msra.mxu0 0
        %1327 = vmatpush.bf16.msra.mxu0 %v1315
        %1328 = vmatmul.bf16.gmra.mxu0 %v1318
        %v1329 = vpop.f32.mrf.mxu0
        %v1330 = vadd.f32 0.0, %v1329
        %v1331 = vpop.f32.mrf.mxu0
        %v1332 = vadd.f32 0.0, %v1331
        %1333 = vdwg.mxu0
        %v1336 = vunpack.c.l.b16 %v1307
        %v1337 = vunpack.c.l.b16 %v1308
        %v1338 = vpack.c.b16 %v1337, %v1336
        %1339 = vrot.lane.b32.xlu0 %v878, 32
        %v1340 = vpop.permute.xlu0 %1339
        %v1343 = vsel %vm792, %v1338, 0
        %1345 = vmatpush.bf16.msra.mxu0 0
        %1346 = vmatpush.bf16.msra.mxu0 0
        %1347 = vmatpush.bf16.msra.mxu0 0
        %1348 = vmatpush.bf16.msra.mxu0 0
        %1349 = vmatpush.bf16.msra.mxu0 0
        %1350 = vmatpush.bf16.msra.mxu0 0
        %1351 = vmatpush.bf16.msra.mxu0 0
        %1352 = vmatpush.bf16.msra.mxu0 %v1340
        %1353 = vmatmul.bf16.gmra.mxu0 %v1343
        %v1354 = vpop.f32.mrf.mxu0
        %v1355 = vadd.f32 0.0, %v1354
        %v1356 = vpop.f32.mrf.mxu0
        %v1357 = vadd.f32 0.0, %v1356
        %1358 = vdwg.mxu0
        %1363 = vrot.lane.b32.xlu0 %v1022, 32
        %v1364 = vpop.permute.xlu0 %1363
        %1365 = vrot.lane.b32.xlu0 %v1024, 32
        %v1366 = vpop.permute.xlu0 %1365
        %1367 = vrot.lane.b32.xlu0 %v1047, 32
        %v1368 = vpop.permute.xlu0 %1367
        %1369 = vrot.lane.b32.xlu0 %v1049, 32
        %v1370 = vpop.permute.xlu0 %1369
        %1379 = vrot.lane.b32.xlu0 %v1176, 64
        %v1380 = vpop.permute.xlu0 %1379
        %1381 = vrot.lane.b32.xlu0 %v1178, 64
        %v1382 = vpop.permute.xlu0 %1381
        %1383 = vrot.lane.b32.xlu0 %v1201, 64
        %v1384 = vpop.permute.xlu0 %1383
        %1385 = vrot.lane.b32.xlu0 %v1203, 64
        %v1386 = vpop.permute.xlu0 %1385
        %1395 = vrot.lane.b32.xlu0 %v1330, 96
        %v1396 = vpop.permute.xlu0 %1395
        %1397 = vrot.lane.b32.xlu0 %v1332, 96
        %v1398 = vpop.permute.xlu0 %1397
        %1399 = vrot.lane.b32.xlu0 %v1355, 96
        %v1400 = vpop.permute.xlu0 %1399
        %1401 = vrot.lane.b32.xlu0 %v1357, 96
        %v1402 = vpop.permute.xlu0 %1401
        %v1407 = vsel %vm733, %v865, %v1364
        %v1408 = vsel %vm733, %v867, %v1366
        %v1409 = vsel %vm733, %v893, %v1368
        %v1410 = vsel %vm733, %v895, %v1370
        %vm1411 = vcmask 523264
        %v1412 = vsel %vm1411, %v1407, %v1380
        %v1413 = vsel %vm1411, %v1408, %v1382
        %v1414 = vsel %vm1411, %v1409, %v1384
        %v1415 = vsel %vm1411, %v1410, %v1386
        %vm1416 = vcmask 785408
        %v1417 = vsel %vm1416, %v1412, %v1396
        %v1418 = vsel %vm1416, %v1413, %v1398
        %v1419 = vsel %vm1416, %v1414, %v1400
        %v1420 = vsel %vm1416, %v1415, %v1402
        %v1421 = vpack.c.bf16 %v1418, %v1417
        %v1422 = vpack.c.bf16 %v1420, %v1419
        %v1423 = vld [vmem:[%s387] sm:$0xf]
        %v1424 = vld [vmem:[%s387 + $0x4] sm:$0xf]
        %v1425 = vld [vmem:[%s387 + $0x8] sm:$0xf]
        %v1426 = vld [vmem:[%s387 + $0xc] sm:$0xf]
        %v1427 = vld [vmem:[%s387 + $0x10] sm:$0xf]
        %v1428 = vld [vmem:[%s387 + $0x14] sm:$0xf]
        %v1429 = vld [vmem:[%s387 + $0x18] sm:$0xf]
        %v1430 = vld [vmem:[%s387 + $0x1c] sm:$0xf]
        %v1431 = vld [vmem:[%s387 + $0x20] sm:$0xf]
        %v1432 = vld [vmem:[%s387 + $0x24] sm:$0xf]
        %v1433 = vld [vmem:[%s387 + $0x28] sm:$0xf]
        %v1434 = vld [vmem:[%s387 + $0x2c] sm:$0xf]
        %v1435 = vld [vmem:[%s387 + $0x30] sm:$0xf]
        %v1436 = vld [vmem:[%s387 + $0x34] sm:$0xf]
        %v1437 = vld [vmem:[%s387 + $0x38] sm:$0xf]
        %v1438 = vld [vmem:[%s387 + $0x3c] sm:$0xf]
        %v1439 = vperm.slane %v483, 0
        %v1456 = vunpack.c.l.b16 %v1423
        %v1457 = vunpack.c.l.b16 %v1424
        %v1458 = vunpack.c.l.b16 %v1425
        %v1459 = vunpack.c.l.b16 %v1426
        %v1460 = vunpack.c.l.b16 %v1427
        %v1461 = vunpack.c.l.b16 %v1428
        %v1462 = vunpack.c.l.b16 %v1429
        %v1463 = vunpack.c.l.b16 %v1430
        %v1464 = vunpack.c.l.b16 %v1431
        %v1465 = vunpack.c.l.b16 %v1432
        %v1466 = vunpack.c.l.b16 %v1433
        %v1467 = vunpack.c.l.b16 %v1434
        %v1468 = vunpack.c.l.b16 %v1435
        %v1469 = vunpack.c.l.b16 %v1436
        %v1470 = vunpack.c.l.b16 %v1437
        %v1471 = vunpack.c.l.b16 %v1438
        %v1472 = vpack.c.b16 %v1457, %v1456
        %v1473 = vpack.c.b16 %v1459, %v1458
        %v1474 = vpack.c.b16 %v1461, %v1460
        %v1475 = vpack.c.b16 %v1463, %v1462
        %v1476 = vpack.c.b16 %v1465, %v1464
        %v1477 = vpack.c.b16 %v1467, %v1466
        %v1478 = vpack.c.b16 %v1469, %v1468
        %v1479 = vpack.c.b16 %v1471, %v1470
        %1488 = vmatpush.bf16.msra.mxu0 %v1479
        %1489 = vmatpush.bf16.msra.mxu0 %v1478
        %1490 = vmatpush.bf16.msra.mxu0 %v1477
        %1491 = vmatpush.bf16.msra.mxu0 %v1476
        %1492 = vmatpush.bf16.msra.mxu0 %v1475
        %1493 = vmatpush.bf16.msra.mxu0 %v1474
        %1494 = vmatpush.bf16.msra.mxu0 %v1473
        %1495 = vmatpush.bf16.msra.mxu0 %v1472
        %1496 = vmatmul.bf16.gmra.mxu0 %v1421
        %v1497 = vpop.f32.mrf.mxu0
        %v1498 = vadd.f32 %v1439, %v1497
        %v1499 = vpop.f32.mrf.mxu0
        %v1500 = vadd.f32 %v1439, %v1499
        %1501 = vmatmul.bf16.gmra.mxu0 %v1422
        %v1502 = vpop.f32.mrf.mxu0
        %v1503 = vadd.f32 %v1439, %v1502
        %v1504 = vpop.f32.mrf.mxu0
        %v1505 = vadd.f32 %v1439, %v1504
        %1506 = vdwg.mxu0
        %v1507 = vadd.f32 %v477, %v1498
        %v1508 = vadd.f32 %v478, %v1500
        %v1509 = vadd.f32 %v479, %v1503
        %v1510 = vadd.f32 %v480, %v1505
        %1511 = vadd.xlane.f32.xlu0 %v1507
        %v1512 = vpop.xlane.xlu0 %1511
        %1513 = vadd.xlane.f32.xlu0 %v1508
        %v1514 = vpop.xlane.xlu0 %1513
        %1515 = vadd.xlane.f32.xlu0 %v1509
        %v1516 = vpop.xlane.xlu0 %1515
        %1517 = vadd.xlane.f32.xlu0 %v1510
        %v1518 = vpop.xlane.xlu0 %1517
        %v1519 = vrcp.pop 128.0
        %v1520 = vmul.f32 128.0, %v1519
        %v1521 = vsub.f32 1.0, %v1520
        %v1522 = vmul.f32 %v1519, %v1521
        %v1523 = vadd.f32 %v1519, %v1522
        %vm1524 = vweird.f32 %v1519
        %v1525 = vsel %vm1524, %v1519, %v1523
        %v1526 = vmul.f32 %v1512, %v1525
        %v1527 = vmul.f32 %v1514, %v1525
        %v1528 = vmul.f32 %v1516, %v1525
        %v1529 = vmul.f32 %v1518, %v1525
        %v1530 = vsub.f32 %v1507, %v1526
        %v1531 = vsub.f32 %v1508, %v1527
        %v1532 = vsub.f32 %v1509, %v1528
        %v1533 = vsub.f32 %v1510, %v1529
        %v1534 = vmul.f32 %v1530, %v1530
        %v1535 = vmul.f32 %v1531, %v1531
        %v1536 = vmul.f32 %v1532, %v1532
        %v1537 = vmul.f32 %v1533, %v1533
        %1538 = vadd.xlane.f32.xlu0 %v1534
        %v1539 = vpop.xlane.xlu0 %1538
        %1540 = vadd.xlane.f32.xlu0 %v1535
        %v1541 = vpop.xlane.xlu0 %1540
        %1542 = vadd.xlane.f32.xlu0 %v1536
        %v1543 = vpop.xlane.xlu0 %1542
        %1544 = vadd.xlane.f32.xlu0 %v1537
        %v1545 = vpop.xlane.xlu0 %1544
        %v1546 = vmul.f32 %v1539, %v1525
        %v1547 = vmul.f32 %v1541, %v1525
        %v1548 = vmul.f32 %v1543, %v1525
        %v1549 = vmul.f32 %v1545, %v1525
        %v1550 = vadd.f32 %v1546, 1e-05
        %v1551 = vadd.f32 %v1547, 1e-05
        %v1552 = vadd.f32 %v1548, 1e-05
        %v1553 = vadd.f32 %v1549, 1e-05
        %v1554 = vrsqrt.pop %v1550
        %v1555 = vmul.f32 %v1554, %v1550
        %v1556 = vmul.f32 %v1555, %v1554
        %v1557 = vmul.f32 0.5, %v1556
        %v1558 = vsub.f32 1.5, %v1557
        %v1559 = vmul.f32 %v1554, %v1558
        %vm1560 = vweird.f32 %v1550
        %vm1561 = vweird.f32 %v1554
        %vm1562 = vmor %vm1560, %vm1561
        %v1563 = vsel %vm1562, %v1554, %v1559
        %v1564 = vrsqrt.pop %v1551
        %v1565 = vmul.f32 %v1564, %v1551
        %v1566 = vmul.f32 %v1565, %v1564
        %v1567 = vmul.f32 0.5, %v1566
        %v1568 = vsub.f32 1.5, %v1567
        %v1569 = vmul.f32 %v1564, %v1568
        %vm1570 = vweird.f32 %v1551
        %vm1571 = vweird.f32 %v1564
        %vm1572 = vmor %vm1570, %vm1571
        %v1573 = vsel %vm1572, %v1564, %v1569
        %v1574 = vrsqrt.pop %v1552
        %v1575 = vmul.f32 %v1574, %v1552
        %v1576 = vmul.f32 %v1575, %v1574
        %v1577 = vmul.f32 0.5, %v1576
        %v1578 = vsub.f32 1.5, %v1577
        %v1579 = vmul.f32 %v1574, %v1578
        %vm1580 = vweird.f32 %v1552
        %vm1581 = vweird.f32 %v1574
        %vm1582 = vmor %vm1580, %vm1581
        %v1583 = vsel %vm1582, %v1574, %v1579
        %v1584 = vrsqrt.pop %v1553
        %v1585 = vmul.f32 %v1584, %v1553
        %v1586 = vmul.f32 %v1585, %v1584
        %v1587 = vmul.f32 0.5, %v1586
        %v1588 = vsub.f32 1.5, %v1587
        %v1589 = vmul.f32 %v1584, %v1588
        %vm1590 = vweird.f32 %v1553
        %vm1591 = vweird.f32 %v1584
        %vm1592 = vmor %vm1590, %vm1591
        %v1593 = vsel %vm1592, %v1584, %v1589
        %v1594 = vmul.f32 %v1530, %v1563
        %v1595 = vmul.f32 %v1531, %v1573
        %v1596 = vmul.f32 %v1532, %v1583
        %v1597 = vmul.f32 %v1533, %v1593
        %v1598 = vperm.slane %v483, 1
        %v1599 = vmul.f32 %v1594, %v1598
        %v1600 = vmul.f32 %v1595, %v1598
        %v1601 = vmul.f32 %v1596, %v1598
        %v1602 = vmul.f32 %v1597, %v1598
        %v1603 = vperm.slane %v483, 2
        %v1604 = vadd.f32 %v1599, %v1603
        %v1605 = vadd.f32 %v1600, %v1603
        %v1606 = vadd.f32 %v1601, %v1603
        %v1607 = vadd.f32 %v1602, %v1603
        %v1608 = vpack.c.bf16 %v1605, %v1604
        %v1609 = vpack.c.bf16 %v1607, %v1606
        %v1610 = vld [vmem:[%s397] sm:$0xff]
        %v1611 = vld [vmem:[%s397 + $0x8] sm:$0xff]
        %v1612 = vld [vmem:[%s397 + $0x10] sm:$0xff]
        %v1613 = vld [vmem:[%s397 + $0x18] sm:$0xff]
        %v1614 = vld [vmem:[%s397 + $0x20] sm:$0xff]
        %v1615 = vld [vmem:[%s397 + $0x28] sm:$0xff]
        %v1616 = vld [vmem:[%s397 + $0x30] sm:$0xff]
        %v1617 = vld [vmem:[%s397 + $0x38] sm:$0xff]
        %v1618 = vld [vmem:[%s397 + $0x40] sm:$0xff]
        %v1619 = vld [vmem:[%s397 + $0x48] sm:$0xff]
        %v1620 = vld [vmem:[%s397 + $0x50] sm:$0xff]
        %v1621 = vld [vmem:[%s397 + $0x58] sm:$0xff]
        %v1622 = vld [vmem:[%s397 + $0x60] sm:$0xff]
        %v1623 = vld [vmem:[%s397 + $0x68] sm:$0xff]
        %v1624 = vld [vmem:[%s397 + $0x70] sm:$0xff]
        %v1625 = vld [vmem:[%s397 + $0x78] sm:$0xff]
        %v1626 = vperm.slane %v483, 3
        %v1627 = vperm.slane %v484, 3
        %v1644 = vunpack.c.l.b16 %v1610
        %v1645 = vunpack.c.h.b16 %v1610
        %v1646 = vunpack.c.l.b16 %v1611
        %v1647 = vunpack.c.h.b16 %v1611
        %v1648 = vunpack.c.l.b16 %v1612
        %v1649 = vunpack.c.h.b16 %v1612
        %v1650 = vunpack.c.l.b16 %v1613
        %v1651 = vunpack.c.h.b16 %v1613
        %v1652 = vunpack.c.l.b16 %v1614
        %v1653 = vunpack.c.h.b16 %v1614
        %v1654 = vunpack.c.l.b16 %v1615
        %v1655 = vunpack.c.h.b16 %v1615
        %v1656 = vunpack.c.l.b16 %v1616
        %v1657 = vunpack.c.h.b16 %v1616
        %v1658 = vunpack.c.l.b16 %v1617
        %v1659 = vunpack.c.h.b16 %v1617
        %v1660 = vunpack.c.l.b16 %v1618
        %v1661 = vunpack.c.h.b16 %v1618
        %v1662 = vunpack.c.l.b16 %v1619
        %v1663 = vunpack.c.h.b16 %v1619
        %v1664 = vunpack.c.l.b16 %v1620
        %v1665 = vunpack.c.h.b16 %v1620
        %v1666 = vunpack.c.l.b16 %v1621
        %v1667 = vunpack.c.h.b16 %v1621
        %v1668 = vunpack.c.l.b16 %v1622
        %v1669 = vunpack.c.h.b16 %v1622
        %v1670 = vunpack.c.l.b16 %v1623
        %v1671 = vunpack.c.h.b16 %v1623
        %v1672 = vunpack.c.l.b16 %v1624
        %v1673 = vunpack.c.h.b16 %v1624
        %v1674 = vunpack.c.l.b16 %v1625
        %v1675 = vunpack.c.h.b16 %v1625
        %v1676 = vpack.c.b16 %v1646, %v1644
        %v1677 = vpack.c.b16 %v1647, %v1645
        %v1678 = vpack.c.b16 %v1650, %v1648
        %v1679 = vpack.c.b16 %v1651, %v1649
        %v1680 = vpack.c.b16 %v1654, %v1652
        %v1681 = vpack.c.b16 %v1655, %v1653
        %v1682 = vpack.c.b16 %v1658, %v1656
        %v1683 = vpack.c.b16 %v1659, %v1657
        %v1684 = vpack.c.b16 %v1662, %v1660
        %v1685 = vpack.c.b16 %v1663, %v1661
        %v1686 = vpack.c.b16 %v1666, %v1664
        %v1687 = vpack.c.b16 %v1667, %v1665
        %v1688 = vpack.c.b16 %v1670, %v1668
        %v1689 = vpack.c.b16 %v1671, %v1669
        %v1690 = vpack.c.b16 %v1674, %v1672
        %v1691 = vpack.c.b16 %v1675, %v1673
        %1708 = vmatpush.bf16.msra.mxu0 %v1690
        %1709 = vmatpush.bf16.msra.mxu0 %v1688
        %1710 = vmatpush.bf16.msra.mxu0 %v1686
        %1711 = vmatpush.bf16.msra.mxu0 %v1684
        %1712 = vmatpush.bf16.msra.mxu0 %v1682
        %1713 = vmatpush.bf16.msra.mxu0 %v1680
        %1714 = vmatpush.bf16.msra.mxu0 %v1678
        %1715 = vmatpush.bf16.msra.mxu0 %v1676
        %1716 = vmatmul.bf16.gmra.mxu0 %v1608
        %v1717 = vpop.f32.mrf.mxu0
        %v1718 = vadd.f32 %v1626, %v1717
        %v1719 = vpop.f32.mrf.mxu0
        %v1720 = vadd.f32 %v1626, %v1719
        %1721 = vmatmul.bf16.gmra.mxu0 %v1609
        %v1722 = vpop.f32.mrf.mxu0
        %v1723 = vadd.f32 %v1626, %v1722
        %v1724 = vpop.f32.mrf.mxu0
        %v1725 = vadd.f32 %v1626, %v1724
        %1726 = vdwg.mxu0
        %1727 = vmatpush.bf16.msra.mxu0 %v1691
        %1728 = vmatpush.bf16.msra.mxu0 %v1689
        %1729 = vmatpush.bf16.msra.mxu0 %v1687
        %1730 = vmatpush.bf16.msra.mxu0 %v1685
        %1731 = vmatpush.bf16.msra.mxu0 %v1683
        %1732 = vmatpush.bf16.msra.mxu0 %v1681
        %1733 = vmatpush.bf16.msra.mxu0 %v1679
        %1734 = vmatpush.bf16.msra.mxu0 %v1677
        %1735 = vmatmul.bf16.gmra.mxu0 %v1608
        %v1736 = vpop.f32.mrf.mxu0
        %v1737 = vadd.f32 %v1627, %v1736
        %v1738 = vpop.f32.mrf.mxu0
        %v1739 = vadd.f32 %v1627, %v1738
        %1740 = vmatmul.bf16.gmra.mxu0 %v1609
        %v1741 = vpop.f32.mrf.mxu0
        %v1742 = vadd.f32 %v1627, %v1741
        %v1743 = vpop.f32.mrf.mxu0
        %v1744 = vadd.f32 %v1627, %v1743
        %1745 = vdwg.mxu0
        %v1746 = vmul.f32 %v1718, 0.5
        %v1747 = vmul.f32 %v1737, 0.5
        %v1748 = vmul.f32 %v1720, 0.5
        %v1749 = vmul.f32 %v1739, 0.5
        %v1750 = vmul.f32 %v1723, 0.5
        %v1751 = vmul.f32 %v1742, 0.5
        %v1752 = vmul.f32 %v1725, 0.5
        %v1753 = vmul.f32 %v1744, 0.5
        %v1754 = vmul.f32 %v1718, 0.044715
        %v1755 = vmul.f32 %v1737, 0.044715
        %v1756 = vmul.f32 %v1720, 0.044715
        %v1757 = vmul.f32 %v1739, 0.044715
        %v1758 = vmul.f32 %v1723, 0.044715
        %v1759 = vmul.f32 %v1742, 0.044715
        %v1760 = vmul.f32 %v1725, 0.044715
        %v1761 = vmul.f32 %v1744, 0.044715
        %v1762 = vmul.f32 %v1754, %v1718
        %v1763 = vmul.f32 %v1755, %v1737
        %v1764 = vmul.f32 %v1756, %v1720
        %v1765 = vmul.f32 %v1757, %v1739
        %v1766 = vmul.f32 %v1758, %v1723
        %v1767 = vmul.f32 %v1759, %v1742
        %v1768 = vmul.f32 %v1760, %v1725
        %v1769 = vmul.f32 %v1761, %v1744
        %v1770 = vmul.f32 %v1762, %v1718
        %v1771 = vmul.f32 %v1763, %v1737
        %v1772 = vmul.f32 %v1764, %v1720
        %v1773 = vmul.f32 %v1765, %v1739
        %v1774 = vmul.f32 %v1766, %v1723
        %v1775 = vmul.f32 %v1767, %v1742
        %v1776 = vmul.f32 %v1768, %v1725
        %v1777 = vmul.f32 %v1769, %v1744
        %v1778 = vadd.f32 %v1718, %v1770
        %v1779 = vadd.f32 %v1737, %v1771
        %v1780 = vadd.f32 %v1720, %v1772
        %v1781 = vadd.f32 %v1739, %v1773
        %v1782 = vadd.f32 %v1723, %v1774
        %v1783 = vadd.f32 %v1742, %v1775
        %v1784 = vadd.f32 %v1725, %v1776
        %v1785 = vadd.f32 %v1744, %v1777
        %v1786 = vmul.f32 %v1778, 0.7978846
        %v1787 = vmul.f32 %v1779, 0.7978846
        %v1788 = vmul.f32 %v1780, 0.7978846
        %v1789 = vmul.f32 %v1781, 0.7978846
        %v1790 = vmul.f32 %v1782, 0.7978846
        %v1791 = vmul.f32 %v1783, 0.7978846
        %v1792 = vmul.f32 %v1784, 0.7978846
        %v1793 = vmul.f32 %v1785, 0.7978846
        %v1794 = vtanh.pop %v1786
        %v1795 = vtanh.pop %v1787
        %v1796 = vtanh.pop %v1788
        %v1797 = vtanh.pop %v1789
        %v1798 = vtanh.pop %v1790
        %v1799 = vtanh.pop %v1791
        %v1800 = vtanh.pop %v1792
        %v1801 = vtanh.pop %v1793
        %v1802 = vadd.f32 %v1794, 1.0
        %v1803 = vadd.f32 %v1795, 1.0
        %v1804 = vadd.f32 %v1796, 1.0
        %v1805 = vadd.f32 %v1797, 1.0
        %v1806 = vadd.f32 %v1798, 1.0
        %v1807 = vadd.f32 %v1799, 1.0
        %v1808 = vadd.f32 %v1800, 1.0
        %v1809 = vadd.f32 %v1801, 1.0
        %v1810 = vmul.f32 %v1746, %v1802
        %v1811 = vmul.f32 %v1747, %v1803
        %v1812 = vmul.f32 %v1748, %v1804
        %v1813 = vmul.f32 %v1749, %v1805
        %v1814 = vmul.f32 %v1750, %v1806
        %v1815 = vmul.f32 %v1751, %v1807
        %v1816 = vmul.f32 %v1752, %v1808
        %v1817 = vmul.f32 %v1753, %v1809
        %v1818 = vpack.c.bf16 %v1812, %v1810
        %v1819 = vpack.c.bf16 %v1813, %v1811
        %v1820 = vpack.c.bf16 %v1816, %v1814
        %v1821 = vpack.c.bf16 %v1817, %v1815
        %v1822 = vld [vmem:[%s407] sm:$0xf]
        %v1823 = vld [vmem:[%s407 + $0x4] sm:$0xf]
        %v1824 = vld [vmem:[%s407 + $0x8] sm:$0xf]
        %v1825 = vld [vmem:[%s407 + $0xc] sm:$0xf]
        %v1826 = vld [vmem:[%s407 + $0x10] sm:$0xf]
        %v1827 = vld [vmem:[%s407 + $0x14] sm:$0xf]
        %v1828 = vld [vmem:[%s407 + $0x18] sm:$0xf]
        %v1829 = vld [vmem:[%s407 + $0x1c] sm:$0xf]
        %v1830 = vld [vmem:[%s407 + $0x20] sm:$0xf]
        %v1831 = vld [vmem:[%s407 + $0x24] sm:$0xf]
        %v1832 = vld [vmem:[%s407 + $0x28] sm:$0xf]
        %v1833 = vld [vmem:[%s407 + $0x2c] sm:$0xf]
        %v1834 = vld [vmem:[%s407 + $0x30] sm:$0xf]
        %v1835 = vld [vmem:[%s407 + $0x34] sm:$0xf]
        %v1836 = vld [vmem:[%s407 + $0x38] sm:$0xf]
        %v1837 = vld [vmem:[%s407 + $0x3c] sm:$0xf]
        %v1838 = vld [vmem:[%s407 + $0x40] sm:$0xf]
        %v1839 = vld [vmem:[%s407 + $0x44] sm:$0xf]
        %v1840 = vld [vmem:[%s407 + $0x48] sm:$0xf]
        %v1841 = vld [vmem:[%s407 + $0x4c] sm:$0xf]
        %v1842 = vld [vmem:[%s407 + $0x50] sm:$0xf]
        %v1843 = vld [vmem:[%s407 + $0x54] sm:$0xf]
        %v1844 = vld [vmem:[%s407 + $0x58] sm:$0xf]
        %v1845 = vld [vmem:[%s407 + $0x5c] sm:$0xf]
        %v1846 = vld [vmem:[%s407 + $0x60] sm:$0xf]
        %v1847 = vld [vmem:[%s407 + $0x64] sm:$0xf]
        %v1848 = vld [vmem:[%s407 + $0x68] sm:$0xf]
        %v1849 = vld [vmem:[%s407 + $0x6c] sm:$0xf]
        %v1850 = vld [vmem:[%s407 + $0x70] sm:$0xf]
        %v1851 = vld [vmem:[%s407 + $0x74] sm:$0xf]
        %v1852 = vld [vmem:[%s407 + $0x78] sm:$0xf]
        %v1853 = vld [vmem:[%s407 + $0x7c] sm:$0xf]
        %v1854 = vperm.slane %v483, 4
        %v1887 = vunpack.c.l.b16 %v1822
        %v1888 = vunpack.c.l.b16 %v1823
        %v1889 = vunpack.c.l.b16 %v1824
        %v1890 = vunpack.c.l.b16 %v1825
        %v1891 = vunpack.c.l.b16 %v1826
        %v1892 = vunpack.c.l.b16 %v1827
        %v1893 = vunpack.c.l.b16 %v1828
        %v1894 = vunpack.c.l.b16 %v1829
        %v1895 = vunpack.c.l.b16 %v1830
        %v1896 = vunpack.c.l.b16 %v1831
        %v1897 = vunpack.c.l.b16 %v1832
        %v1898 = vunpack.c.l.b16 %v1833
        %v1899 = vunpack.c.l.b16 %v1834
        %v1900 = vunpack.c.l.b16 %v1835
        %v1901 = vunpack.c.l.b16 %v1836
        %v1902 = vunpack.c.l.b16 %v1837
        %v1903 = vunpack.c.l.b16 %v1838
        %v1904 = vunpack.c.l.b16 %v1839
        %v1905 = vunpack.c.l.b16 %v1840
        %v1906 = vunpack.c.l.b16 %v1841
        %v1907 = vunpack.c.l.b16 %v1842
        %v1908 = vunpack.c.l.b16 %v1843
        %v1909 = vunpack.c.l.b16 %v1844
        %v1910 = vunpack.c.l.b16 %v1845
        %v1911 = vunpack.c.l.b16 %v1846
        %v1912 = vunpack.c.l.b16 %v1847
        %v1913 = vunpack.c.l.b16 %v1848
        %v1914 = vunpack.c.l.b16 %v1849
        %v1915 = vunpack.c.l.b16 %v1850
        %v1916 = vunpack.c.l.b16 %v1851
        %v1917 = vunpack.c.l.b16 %v1852
        %v1918 = vunpack.c.l.b16 %v1853
        %v1919 = vpack.c.b16 %v1888, %v1887
        %v1920 = vpack.c.b16 %v1890, %v1889
        %v1921 = vpack.c.b16 %v1892, %v1891
        %v1922 = vpack.c.b16 %v1894, %v1893
        %v1923 = vpack.c.b16 %v1896, %v1895
        %v1924 = vpack.c.b16 %v1898, %v1897
        %v1925 = vpack.c.b16 %v1900, %v1899
        %v1926 = vpack.c.b16 %v1902, %v1901
        %v1927 = vpack.c.b16 %v1904, %v1903
        %v1928 = vpack.c.b16 %v1906, %v1905
        %v1929 = vpack.c.b16 %v1908, %v1907
        %v1930 = vpack.c.b16 %v1910, %v1909
        %v1931 = vpack.c.b16 %v1912, %v1911
        %v1932 = vpack.c.b16 %v1914, %v1913
        %v1933 = vpack.c.b16 %v1916, %v1915
        %v1934 = vpack.c.b16 %v1918, %v1917
        %1951 = vmatpush.bf16.msra.mxu0 %v1926
        %1952 = vmatpush.bf16.msra.mxu0 %v1925
        %1953 = vmatpush.bf16.msra.mxu0 %v1924
        %1954 = vmatpush.bf16.msra.mxu0 %v1923
        %1955 = vmatpush.bf16.msra.mxu0 %v1922
        %1956 = vmatpush.bf16.msra.mxu0 %v1921
        %1957 = vmatpush.bf16.msra.mxu0 %v1920
        %1958 = vmatpush.bf16.msra.mxu0 %v1919
        %1959 = vmatmul.bf16.gmra.mxu0 %v1818
        %v1960 = vpop.f32.mrf.mxu0
        %v1961 = vadd.f32 %v1854, %v1960
        %v1962 = vpop.f32.mrf.mxu0
        %v1963 = vadd.f32 %v1854, %v1962
        %1964 = vmatmul.bf16.gmra.mxu0 %v1820
        %v1965 = vpop.f32.mrf.mxu0
        %v1966 = vadd.f32 %v1854, %v1965
        %v1967 = vpop.f32.mrf.mxu0
        %v1968 = vadd.f32 %v1854, %v1967
        %1969 = vdwg.mxu0
        %1970 = vmatpush.bf16.msra.mxu0 %v1934
        %1971 = vmatpush.bf16.msra.mxu0 %v1933
        %1972 = vmatpush.bf16.msra.mxu0 %v1932
        %1973 = vmatpush.bf16.msra.mxu0 %v1931
        %1974 = vmatpush.bf16.msra.mxu0 %v1930
        %1975 = vmatpush.bf16.msra.mxu0 %v1929
        %1976 = vmatpush.bf16.msra.mxu0 %v1928
        %1977 = vmatpush.bf16.msra.mxu0 %v1927
        %1978 = vmatmul.bf16.gmra.mxu0 %v1819
        %v1979 = vpop.f32.mrf.mxu0
        %v1980 = vadd.f32 %v1961, %v1979
        %v1981 = vpop.f32.mrf.mxu0
        %v1982 = vadd.f32 %v1963, %v1981
        %1983 = vmatmul.bf16.gmra.mxu0 %v1821
        %v1984 = vpop.f32.mrf.mxu0
        %v1985 = vadd.f32 %v1966, %v1984
        %v1986 = vpop.f32.mrf.mxu0
        %v1987 = vadd.f32 %v1968, %v1986
        %1988 = vdwg.mxu0
        %v1989 = vadd.f32 %v1604, %v1980
        %v1990 = vadd.f32 %v1605, %v1982
        %v1991 = vadd.f32 %v1606, %v1985
        %v1992 = vadd.f32 %v1607, %v1987
        %1993 = vadd.xlane.f32.xlu0 %v1989
        %v1994 = vpop.xlane.xlu0 %1993
        %1995 = vadd.xlane.f32.xlu0 %v1990
        %v1996 = vpop.xlane.xlu0 %1995
        %1997 = vadd.xlane.f32.xlu0 %v1991
        %v1998 = vpop.xlane.xlu0 %1997
        %1999 = vadd.xlane.f32.xlu0 %v1992
        %v2000 = vpop.xlane.xlu0 %1999
        %v2001 = vmul.f32 %v1994, %v1525
        %v2002 = vmul.f32 %v1996, %v1525
        %v2003 = vmul.f32 %v1998, %v1525
        %v2004 = vmul.f32 %v2000, %v1525
        %v2005 = vsub.f32 %v1989, %v2001
        %v2006 = vsub.f32 %v1990, %v2002
        %v2007 = vsub.f32 %v1991, %v2003
        %v2008 = vsub.f32 %v1992, %v2004
        %v2009 = vmul.f32 %v2005, %v2005
        %v2010 = vmul.f32 %v2006, %v2006
        %v2011 = vmul.f32 %v2007, %v2007
        %v2012 = vmul.f32 %v2008, %v2008
        %2013 = vadd.xlane.f32.xlu0 %v2009
        %v2014 = vpop.xlane.xlu0 %2013
        %2015 = vadd.xlane.f32.xlu0 %v2010
        %v2016 = vpop.xlane.xlu0 %2015
        %2017 = vadd.xlane.f32.xlu0 %v2011
        %v2018 = vpop.xlane.xlu0 %2017
        %2019 = vadd.xlane.f32.xlu0 %v2012
        %v2020 = vpop.xlane.xlu0 %2019
        %v2021 = vmul.f32 %v2014, %v1525
        %v2022 = vmul.f32 %v2016, %v1525
        %v2023 = vmul.f32 %v2018, %v1525
        %v2024 = vmul.f32 %v2020, %v1525
        %v2025 = vadd.f32 %v2021, 1e-05
        %v2026 = vadd.f32 %v2022, 1e-05
        %v2027 = vadd.f32 %v2023, 1e-05
        %v2028 = vadd.f32 %v2024, 1e-05
        %v2029 = vrsqrt.pop %v2025
        %v2030 = vmul.f32 %v2029, %v2025
        %v2031 = vmul.f32 %v2030, %v2029
        %v2032 = vmul.f32 0.5, %v2031
        %v2033 = vsub.f32 1.5, %v2032
        %v2034 = vmul.f32 %v2029, %v2033
        %vm2035 = vweird.f32 %v2025
        %vm2036 = vweird.f32 %v2029
        %vm2037 = vmor %vm2035, %vm2036
        %v2038 = vsel %vm2037, %v2029, %v2034
        %v2039 = vrsqrt.pop %v2026
        %v2040 = vmul.f32 %v2039, %v2026
        %v2041 = vmul.f32 %v2040, %v2039
        %v2042 = vmul.f32 0.5, %v2041
        %v2043 = vsub.f32 1.5, %v2042
        %v2044 = vmul.f32 %v2039, %v2043
        %vm2045 = vweird.f32 %v2026
        %vm2046 = vweird.f32 %v2039
        %vm2047 = vmor %vm2045, %vm2046
        %v2048 = vsel %vm2047, %v2039, %v2044
        %v2049 = vrsqrt.pop %v2027
        %v2050 = vmul.f32 %v2049, %v2027
        %v2051 = vmul.f32 %v2050, %v2049
        %v2052 = vmul.f32 0.5, %v2051
        %v2053 = vsub.f32 1.5, %v2052
        %v2054 = vmul.f32 %v2049, %v2053
        %vm2055 = vweird.f32 %v2027
        %vm2056 = vweird.f32 %v2049
        %vm2057 = vmor %vm2055, %vm2056
        %v2058 = vsel %vm2057, %v2049, %v2054
        %v2059 = vrsqrt.pop %v2028
        %v2060 = vmul.f32 %v2059, %v2028
        %v2061 = vmul.f32 %v2060, %v2059
        %v2062 = vmul.f32 0.5, %v2061
        %v2063 = vsub.f32 1.5, %v2062
        %v2064 = vmul.f32 %v2059, %v2063
        %vm2065 = vweird.f32 %v2028
        %vm2066 = vweird.f32 %v2059
        %vm2067 = vmor %vm2065, %vm2066
        %v2068 = vsel %vm2067, %v2059, %v2064
        %v2069 = vmul.f32 %v2005, %v2038
        %v2070 = vmul.f32 %v2006, %v2048
        %v2071 = vmul.f32 %v2007, %v2058
        %v2072 = vmul.f32 %v2008, %v2068
        %v2073 = vperm.slane %v483, 5
        %v2074 = vmul.f32 %v2069, %v2073
        %v2075 = vmul.f32 %v2070, %v2073
        %v2076 = vmul.f32 %v2071, %v2073
        %v2077 = vmul.f32 %v2072, %v2073
        %v2078 = vperm.slane %v483, 6
        %v2079 = vadd.f32 %v2074, %v2078
        %v2080 = vadd.f32 %v2075, %v2078
        %v2081 = vadd.f32 %v2076, %v2078
        %v2082 = vadd.f32 %v2077, %v2078
        %2083 = vst [vmem:[#allocation2] sm:$0xff] %v2079
        %2084 = vst [vmem:[#allocation2 + $0x8] sm:$0xff] %v2080
        %2085 = vst [vmem:[#allocation2 + $0x10] sm:$0xff] %v2081
        %2086 = vst [vmem:[#allocation2 + $0x18] sm:$0xff] %v2082
        %p2087 = scmp.eq.s32.totalorder %s33, 1
        // Predicated region
        $region73: #{tpu_custom_call.1} parent=43 // pred_check
          %p2088 = pneg %p2087
        $region74: #{tpu_custom_call.1} parent=43 // pred_check_branch
          %2090 = sbr.rel (%p2088) target = $region76
        $region75: #{tpu_custom_call.1} parent=43 // pred_region
          %2091 = vst [vmem:[#allocation14] sm:$0xff] %v2079
          %2092 = vst [vmem:[#allocation14 + $0x8] sm:$0xff] %v2080
          %2093 = vst [vmem:[#allocation14 + $0x10] sm:$0xff] %v2081
          %2094 = vst [vmem:[#allocation14 + $0x18] sm:$0xff] %v2082
        $region76: #{tpu_custom_call.1} parent=43 // pred_fallthru
          _
        // Predicated region
        $region77: #{tpu_custom_call.1} parent=43 // pred_check
          %p2095 = pneg %p214
        $region78: #{tpu_custom_call.1} parent=43 // pred_check_branch
          %2097 = sbr.rel (%p2095) target = $region80
        $region79: #{tpu_custom_call.1} parent=43 // pred_region
          %s2098 = smul.u32 4, %s32
          %2100 = vsyncadd [#allocation5], 0
          %s2101 = smul.addr %s2098, 8
          %s2102 = scalar_lea.hbm %s6, %s2101
          %s2103 = sshll.u32 [#allocation14], 4
          %s2104 = int_to_ptr.vmem [resolvable:$true] %s2103
          %s2105 = sshll.u32 %s2102, 4
          %s2106 = int_to_ptr.hbm [resolvable:$true] %s2105
          %2111 = dma.vmem_to_hbm [thread:$0]  %s2104, 512, %s2106, [#allocation5], 128, 128, 8
        $region80: #{tpu_custom_call.1} parent=43 // pred_fallthru
          _
        // Predicated region
        $region81: #{tpu_custom_call.1} parent=43 // pred_check
          %p2112 = pneg %p214
        $region82: #{tpu_custom_call.1} parent=43 // pred_check_branch
          %2114 = sbr.rel (%p2112) target = $region84
        $region83: #{tpu_custom_call.1} parent=43 // pred_region
          %2116 = dma.done [#allocation5], 512
        $region84: #{tpu_custom_call.1} parent=43 // pred_fallthru
          _
      $region44: #{tpu_custom_call.1} parent=5 // pred_fallthru
        _
      %p2117 = scmp.le.s32.totalorder 2, %s23
      // Predicated region
      $region85: #{tpu_custom_call.1} parent=5 // pred_check
        %p2118 = pneg %p2117
      $region86: #{tpu_custom_call.1} parent=5 // pred_check_branch
        %2120 = sbr.rel (%p2118) target = $region88
      $region87: #{tpu_custom_call.1} parent=5 // pred_region
        %s2121 = ssub.s32 %s23, 2
      $region88: #{tpu_custom_call.1} parent=5 // pred_fallthru
        _
    $region6: #{tpu_custom_call.1} parent=1 // loop_footer
      %s27 = sadd.s32 1, %s23
    $region7: #{tpu_custom_call.1} parent=1 // loop_footer_branch
      %22 = sbr.rel target = $region3
    $region8: #{tpu_custom_call.1} parent=1 // loop_exit
      _
    %2122 = vsyncpa [#allocation4], 1
    %s2123 = scalar_lea.sflag [#allocation4], 1
    %2124 = vsyncpa %s2123, 1
    %2125 = vsyncpa [#allocation7], 1
    %s2126 = scalar_lea.sflag [#allocation7], 1
    %2127 = vsyncpa %s2126, 1
    %2128 = vsyncpa [#allocation10], 1
    %s2129 = scalar_lea.sflag [#allocation10], 1
    %2130 = vsyncpa %s2129, 1
    %2131 = vsyncpa [#allocation13], 1
    %s2132 = scalar_lea.sflag [#allocation13], 1
    %2133 = vsyncpa %s2132, 1
    %2134 = vsyncpa [#allocation5], 1
    %s2135 = scalar_lea.sflag [#allocation5], 1
    %2136 = vsyncpa %s2135, 1

</llo_original>
